<compile_context>
chip_gen: v6e
topology: v6e:2x2x1
jax: 0.10.0
libtpu: 0.0.40
codegen_flags: <defaults>
</compile_context>

<pallas_src>
import functools
import numpy as np

import jax
import jax.numpy as jnp
from jax.experimental import pallas as pl
from jax.experimental.pallas import tpu as pltpu


_VMEM_LIMIT = 32 * 1024 * 1024


# ----------------------------------------------------------------------------
# small helpers
# ----------------------------------------------------------------------------

def _round_up(x, m):
    return (x + m - 1) // m * m


def _pick_tile(padded, cap):
    """Largest multiple of 128 that divides `padded` and is <= cap."""
    best = 128
    d = 128
    while d <= min(padded, cap):
        if padded % d == 0:
            best = d
        d += 128
    return best


# ----------------------------------------------------------------------------
# Pallas matmul kernels (bf16 inputs, f32 accumulate, fused bias/ReLU/LayerNorm)
# ----------------------------------------------------------------------------

def _mm_kernel(x_ref, w_ref, b_ref, o_ref, acc_ref, *, nk, relu):
    k = pl.program_id(2)

    @pl.when(k == 0)
    def _():
        acc_ref[...] = jnp.zeros_like(acc_ref)

    acc_ref[...] += jnp.dot(x_ref[...], w_ref[...],
                            preferred_element_type=jnp.float32)

    @pl.when(k == nk - 1)
    def _():
        r = acc_ref[...] + b_ref[...]
        if relu:
            r = jnp.maximum(r, 0.0)
        o_ref[...] = r.astype(o_ref.dtype)


def _mm_ln_kernel(x_ref, w_ref, b_ref, g_ref, bt_ref, o_ref, acc_ref,
                  *, nk, n_valid, eps):
    k = pl.program_id(2)

    @pl.when(k == 0)
    def _():
        acc_ref[...] = jnp.zeros_like(acc_ref)

    acc_ref[...] += jnp.dot(x_ref[...], w_ref[...],
                            preferred_element_type=jnp.float32)

    @pl.when(k == nk - 1)
    def _():
        r = acc_ref[...] + b_ref[...]
        # LayerNorm over the (possibly padded) channel axis; mask padded lanes.
        cols = jax.lax.broadcasted_iota(jnp.int32, r.shape, 1)
        valid = cols < n_valid
        inv_n = 1.0 / float(n_valid)
        rm = jnp.where(valid, r, 0.0)
        mu = jnp.sum(rm, axis=-1, keepdims=True) * inv_n
        d = jnp.where(valid, r - mu, 0.0)
        var = jnp.sum(d * d, axis=-1, keepdims=True) * inv_n
        r = d * jax.lax.rsqrt(var + eps) * g_ref[...] + bt_ref[...]
        o_ref[...] = r.astype(o_ref.dtype)


@functools.lru_cache(maxsize=None)
def _build_linear(M, K, N, Kp, Np, tm, tk, tn, relu, ln):
    """Returns a jitted fn: (x_f32[M,K], padded params) -> y_f32[M,N]."""
    Mp = _round_up(M, tm)
    nk = Kp // tk
    grid = (Mp // tm, Np // tn, nk)

    x_spec = pl.BlockSpec((tm, tk), lambda i, j, k: (i, k))
    w_spec = pl.BlockSpec((tk, tn), lambda i, j, k: (k, j))
    v_spec = pl.BlockSpec((1, tn), lambda i, j, k: (0, j))
    o_spec = pl.BlockSpec((tm, tn), lambda i, j, k: (i, j))

    if ln:
        kernel = functools.partial(_mm_ln_kernel, nk=nk, n_valid=N, eps=1e-5)
        in_specs = [x_spec, w_spec, v_spec, v_spec, v_spec]
    else:
        kernel = functools.partial(_mm_kernel, nk=nk, relu=relu)
        in_specs = [x_spec, w_spec, v_spec]

    pc = pl.pallas_call(
        kernel,
        out_shape=jax.ShapeDtypeStruct((Mp, Np), jnp.float32),
        grid_spec=pltpu.PrefetchScalarGridSpec(
            num_scalar_prefetch=0,
            grid=grid,
            in_specs=in_specs,
            out_specs=o_spec,
            scratch_shapes=[pltpu.VMEM((tm, tn), jnp.float32)]),
        compiler_params=pltpu.CompilerParams(
            dimension_semantics=("parallel", "parallel", "arbitrary"),
            vmem_limit_bytes=_VMEM_LIMIT),
    )

    def run(x, w, b, g=None, bt=None):
        xb = x.astype(jnp.bfloat16)
        if (Mp, Kp) != (M, K):
            xb = jnp.pad(xb, ((0, Mp - M), (0, Kp - K)))
        if ln:
            y = pc(xb, w, b, g, bt)
        else:
            y = pc(xb, w, b)
        if (Mp, Np) != (M, N):
            y = y[:M, :N]
        return y

    return jax.jit(run)


# ----------------------------------------------------------------------------
# Pallas attention kernel (all B*heads in one launch, online softmax not needed
# at these sizes; pl.reciprocal for the normalization)
# ----------------------------------------------------------------------------

def _attn_kernel(q_ref, k_ref, v_ref, o_ref, *, scale):
    q = q_ref[...]                               # (BH, Nq, Dh) bf16
    k = k_ref[...]                               # (BH, Nk, Dh) bf16
    v = v_ref[...]
    s = jnp.einsum('bqd,bkd->bqk', q, k,
                   preferred_element_type=jnp.float32) * scale
    m = jnp.max(s, axis=-1, keepdims=True)
    p = jnp.exp(s - m)
    denom = jnp.sum(p, axis=-1, keepdims=True)
    p = p * pl.reciprocal(denom, approx=True)
    o = jnp.einsum('bqk,bkd->bqd', p.astype(jnp.bfloat16), v,
                   preferred_element_type=jnp.float32)
    o_ref[...] = o.astype(o_ref.dtype)


@functools.lru_cache(maxsize=None)
def _build_attn(BH, Nq, Nk, Dh, scale):
    pc = pl.pallas_call(
        functools.partial(_attn_kernel, scale=scale),
        out_shape=jax.ShapeDtypeStruct((BH, Nq, Dh), jnp.float32),
        in_specs=[pl.BlockSpec(memory_space=pltpu.MemorySpace.VMEM)] * 3,
        out_specs=pl.BlockSpec(memory_space=pltpu.MemorySpace.VMEM),
        compiler_params=pltpu.CompilerParams(vmem_limit_bytes=_VMEM_LIMIT),
    )

    def run(q, k, v):
        return pc(q.astype(jnp.bfloat16), k.astype(jnp.bfloat16),
                  v.astype(jnp.bfloat16))

    return jax.jit(run)


def pallas_attention(q, k, v, scale):
    BH, Nq, Dh = q.shape
    Nk = k.shape[1]
    fn = _build_attn(int(BH), int(Nq), int(Nk), int(Dh), float(scale))
    return fn(q, k, v)


# ----------------------------------------------------------------------------
# Linear layer with cached padded bf16 weights (+ optional fused LayerNorm)
# ----------------------------------------------------------------------------

class KeyGen:
    def __init__(self, seed=0):
        self._key = jax.random.PRNGKey(seed)
        self._i = 0

    def next(self):
        self._i += 1
        return jax.random.fold_in(self._key, self._i)


class Linear:
    """y = [LN](x @ W + b); W padded/bf16-cast once at init."""

    def __init__(self, kg, K, N, ln=False):
        self.K, self.N, self.ln = int(K), int(N), bool(ln)
        w = jax.random.normal(kg.next(), (K, N), jnp.float32) / np.sqrt(K)
        self.Kp = _round_up(self.K, 128)
        self.Np = _round_up(self.N, 128)
        self.tk = _pick_tile(self.Kp, 1024)
        # LN needs the full channel axis in one lane tile for the reduction.
        self.tn = self.Np if ln else _pick_tile(self.Np, 512)
        self.wp = jnp.zeros((self.Kp, self.Np), jnp.bfloat16) \
                     .at[:K, :N].set(w.astype(jnp.bfloat16))
        self.bp = jnp.zeros((1, self.Np), jnp.float32)
        if ln:
            self.gp = jnp.zeros((1, self.Np), jnp.float32).at[:, :N].set(1.0)
            self.btp = jnp.zeros((1, self.Np), jnp.float32)


def linear_apply(x, lin, relu=False):
    M = int(x.shape[0])
    tm = min(_round_up(M, 8), 256)
    run = _build_linear(M, lin.K, lin.N, lin.Kp, lin.Np,
                        tm, lin.tk, lin.tn, bool(relu), lin.ln)
    if lin.ln:
        return run(x, lin.wp, lin.bp, lin.gp, lin.btp)
    return run(x, lin.wp, lin.bp)


# ----------------------------------------------------------------------------
# NHWC conv / resize glue built on the Pallas matmul
# ----------------------------------------------------------------------------

def space_to_depth(x, p):
    """(B,H,W,C) -> ((B*H/p*W/p, p*p*C), (B, H/p, W/p)); p x p patches."""
    B, H, W, C = x.shape
    x = x.reshape(B, H // p, p, W // p, p, C)
    x = x.transpose(0, 1, 3, 2, 4, 5)
    return x.reshape(B * (H // p) * (W // p), p * p * C), (B, H // p, W // p)


def conv1x1_op(x, lin, relu=False):
    B, H, W, C = x.shape
    y = linear_apply(x.reshape(-1, C), lin, relu)
    return y.reshape(B, H, W, lin.N)


def conv3x3_op(x, lin, relu=False):
    """3x3 conv, stride 1, pad 1: NHWC im2col (no layout transpose) + matmul."""
    B, H, W, C = x.shape
    xp = jnp.pad(x, ((0, 0), (1, 1), (1, 1), (0, 0)))
    cols = [xp[:, dh:dh + H, dw:dw + W, :] for dh in range(3) for dw in range(3)]
    col = jnp.concatenate(cols, axis=-1)          # (B, H, W, 9C)
    return conv1x1_op(col, lin, relu)


def _interp_matrix(out_size, in_size, align_corners):
    if in_size == 1:
        return jnp.ones((out_size, 1), jnp.float32)
    if align_corners:
        if out_size == 1:
            pos = jnp.zeros((1,), jnp.float32)
        else:
            pos = jnp.arange(out_size, dtype=jnp.float32) * \
                (in_size - 1) / (out_size - 1)
    else:
        pos = (jnp.arange(out_size, dtype=jnp.float32) + 0.5) * \
            in_size / out_size - 0.5
        pos = jnp.clip(pos, 0.0, in_size - 1)
    lo = jnp.clip(jnp.floor(pos).astype(jnp.int32), 0, in_size - 2)
    frac = pos - lo.astype(jnp.float32)
    m = jnp.zeros((out_size, in_size), jnp.float32)
    m = m.at[jnp.arange(out_size), lo].add(1.0 - frac)
    m = m.at[jnp.arange(out_size), lo + 1].add(frac)
    return m


def resize_bilinear(x, out_hw, align_corners):
    B, H, W, C = x.shape
    oh, ow = int(out_hw[0]), int(out_hw[1])
    if (oh, ow) == (H, W):
        return x
    Mh = _interp_matrix(oh, H, align_corners)
    Mw = _interp_matrix(ow, W, align_corners)
    y = jnp.einsum('oh,bhwc->bowc', Mh, x)
    return jnp.einsum('pw,bowc->bopc', Mw, y)


def adaptive_avg_pool(x, out_size):
    B, H, W, C = x.shape

    def pool_mat(o, i):
        m = np.zeros((o, i), np.float32)
        for r in range(o):
            s = int(np.floor(r * i / o))
            e = int(np.ceil((r + 1) * i / o))
            m[r, s:e] = 1.0 / (e - s)
        return jnp.asarray(m)

    y = jnp.einsum('oh,bhwc->bowc', pool_mat(out_size, H), x)
    return jnp.einsum('pw,bowc->bopc', pool_mat(out_size, W), y)


# ----------------------------------------------------------------------------
# Modules (all NHWC internally)
# ----------------------------------------------------------------------------

class PVTAttention:
    """PVT-style spatial-reduction attention (dropouts = identity in eval)."""

    def __init__(self, kg, dim, num_heads, sr_ratio):
        self.dim, self.heads, self.sr = dim, num_heads, sr_ratio
        self.scale = (dim // num_heads) ** -0.5
        if sr_ratio > 1:
            self.q = Linear(kg, dim, dim)
            self.kv = Linear(kg, dim, 2 * dim)
            self.sr_lin = Linear(kg, dim * sr_ratio * sr_ratio, dim, ln=True)
        else:
            self.qkv = Linear(kg, dim, 3 * dim)      # fused q/kv projection
        self.proj = Linear(kg, dim, dim)

    def __call__(self, x):                           # x: (B, H, W, C)
        B, H, W, C = x.shape
        N = H * W
        tokens = x.reshape(B * N, C)

        if self.sr > 1:
            q = linear_apply(tokens, self.q)
            xr, (_, h2, w2) = space_to_depth(x, self.sr)
            xr = linear_apply(xr, self.sr_lin)       # matmul + fused LayerNorm
            kv = linear_apply(xr, self.kv)
            k, v = kv[:, :C], kv[:, C:]
            Nk = h2 * w2
        else:
            qkv = linear_apply(tokens, self.qkv)
            q, k, v = qkv[:, :C], qkv[:, C:2 * C], qkv[:, 2 * C:]
            Nk = N

        Dh = C // self.heads

        def to_heads(t, n):
            return t.reshape(B, n, self.heads, Dh).transpose(0, 2, 1, 3) \
                    .reshape(B * self.heads, n, Dh)

        o = pallas_attention(to_heads(q, N), to_heads(k, Nk),
                             to_heads(v, Nk), self.scale)
        o = o.reshape(B, self.heads, N, Dh).transpose(0, 2, 1, 3) \
             .reshape(B * N, C)
        o = linear_apply(o, self.proj)
        return o.reshape(B, H, W, C)


class UperNetHead:
    """mmseg-style UPerHead (PSP + FPN).  BN @ fresh init in eval == identity."""

    def __init__(self, kg, in_channels, channels, num_classes):
        self.pool_scales = (1, 2, 3, 6)
        self.psp = [Linear(kg, in_channels[-1], channels)
                    for _ in self.pool_scales]
        self.bottleneck = Linear(
            kg, (in_channels[-1] + len(self.pool_scales) * channels) * 9, channels)
        self.lateral = [Linear(kg, in_channels[i], channels) for i in range(3)]
        self.fpn = [Linear(kg, channels * 9, channels) for _ in range(3)]
        self.fpn_bottleneck = Linear(kg, 4 * channels * 9, channels)
        self.cls = Linear(kg, channels, num_classes)

    def _psp_forward(self, x):
        outs = [x]
        for scale, lin in zip(self.pool_scales, self.psp):
            p = adaptive_avg_pool(x, scale)
            p = conv1x1_op(p, lin, relu=True)
            outs.append(resize_bilinear(p, x.shape[1:3], align_corners=False))
        out = jnp.concatenate(outs, axis=-1)
        return conv3x3_op(out, self.bottleneck, relu=True)

    def __call__(self, feats):
        laterals = [conv1x1_op(feats[i], self.lateral[i], relu=True)
                    for i in range(3)]
        laterals.append(self._psp_forward(feats[3]))
        for i in range(2, -1, -1):
            laterals[i] = laterals[i] + resize_bilinear(
                laterals[i + 1], laterals[i].shape[1:3], align_corners=False)
        outs = [conv3x3_op(laterals[i], self.fpn[i], relu=True) for i in range(3)]
        outs.append(laterals[3])
        target = outs[0].shape[1:3]
        outs = [outs[0]] + [resize_bilinear(o, target, align_corners=False)
                            for o in outs[1:]]
        out = conv3x3_op(jnp.concatenate(outs, axis=-1),
                         self.fpn_bottleneck, relu=True)
        return conv1x1_op(out, self.cls)


class BackboneStandIn:
    # TODO(synk): ISwinTransformerV3 source unavailable; deterministic
    # patch-embed + patch-merging pyramid with the same output contract.
    def __init__(self, kg, in_chans):
        dims = [96, 192, 384, 768]
        self.dims = dims
        self.patch_embed = Linear(kg, in_chans * 16, dims[0], ln=True)
        self.merge = [Linear(kg, dims[i] * 4, dims[i + 1], ln=True)
                      for i in range(3)]
        self.a_proj = [Linear(kg, dims[i], 256 * 2 ** i) for i in range(4)]
        self.b_proj = [Linear(kg, dims[i], dims[i]) for i in range(4)]

    def __call__(self, x):                           # x: (B, H, W, Cin) NHWC
        B = x.shape[0]
        tok, (_, h, w) = space_to_depth(x, 4)        # 4x4 patch embed
        tok = linear_apply(tok, self.patch_embed)    # matmul + fused LN
        feats = [tok.reshape(B, h, w, self.dims[0])]
        for i in range(3):                           # 2x2 patch merging
            tok, (_, h, w) = space_to_depth(feats[-1], 2)
            tok = linear_apply(tok, self.merge[i])   # matmul + fused LN
            feats.append(tok.reshape(B, h, w, self.dims[i + 1]))
        a_enc = [conv1x1_op(feats[i], self.a_proj[i]) for i in range(4)]
        b_enc = [conv1x1_op(feats[i], self.b_proj[i]) for i in range(4)]
        return feats, a_enc, b_enc


class RegularLandSCDV1Pallas:
    def __init__(self, num_classes=6, in_chans=6):
        kg = KeyGen(0)
        self.backbone = BackboneStandIn(kg, in_chans)
        # conv_channel_compress: conv1x1(256*2^i -> 128*2^i), bias=False
        self.compress = [Linear(kg, 256 * 2 ** i, 128 * 2 ** i) for i in range(4)]
        num_heads, sr_ratio = [2, 4, 8, 16], [8, 4, 2, 1]
        self.attn_conv = [PVTAttention(kg, 128 * 2 ** i, num_heads[i], sr_ratio[i])
                          for i in range(4)]
        self.attn_swin = [PVTAttention(kg, 96 * 2 ** i, num_heads[i], sr_ratio[i])
                          for i in range(4)]
        self.cd_head = UperNetHead(kg, [96, 192, 384, 768], 384, 2)
        self.a_head = UperNetHead(kg, [128, 256, 512, 1024], 512, num_classes)
        self.b_head = UperNetHead(kg, [96, 192, 384, 768], 384, num_classes)

    def __call__(self, inp):                         # inp: (B, C, H, W) NCHW
        size = inp.shape[2:]
        x = inp.transpose(0, 2, 3, 1)                # single NCHW->NHWC
        feats, a_enc, b_enc = self.backbone(x)
        main_ = self.cd_head(feats)
        a_enc = [conv1x1_op(a_enc[i], self.compress[i]) for i in range(4)]
        a_enc = [self.attn_conv[i](a_enc[i]) for i in range(4)]
        b_enc = [self.attn_swin[i](b_enc[i]) for i in range(4)]
        a_out = self.a_head(a_enc)
        b_out = self.b_head(b_enc)
        main_ = resize_bilinear(main_, size, align_corners=True)
        a_out = resize_bilinear(a_out, size, align_corners=True)
        b_out = resize_bilinear(b_out, size, align_corners=True)
        # back to NCHW at the very end to match the PyTorch contract
        return (a_out.transpose(0, 3, 1, 2),
                b_out.transpose(0, 3, 1, 2),
                main_.transpose(0, 3, 1, 2))


# ----------------------------------------------------------------------------

if __name__ == "__main__":
    key = jax.random.PRNGKey(0)
    # (B, in_chans=6, H, W); strides 4/8/16/32 -> feature maps 16/8/4/2.
    inp = jax.random.normal(key, (2, 6, 64, 64), jnp.float32)

    model = RegularLandSCDV1Pallas(num_classes=6, in_chans=6)
    a_seg, b_seg, main_ = model(inp)
    jax.block_until_ready((a_seg, b_seg, main_))

    assert a_seg.shape == (2, 6, 64, 64), a_seg.shape
    assert b_seg.shape == (2, 6, 64, 64), b_seg.shape
    assert main_.shape == (2, 2, 64, 64), main_.shape
    assert bool(jnp.all(jnp.isfinite(a_seg)))
    assert bool(jnp.all(jnp.isfinite(b_seg)))
    assert bool(jnp.all(jnp.isfinite(main_)))
    print("KERNEL_OK")
</pallas_src>

<mosaic_0001>
module attributes {stable_mosaic.version = 11 : i64} {
  func.func @_mm_ln_kernel(%arg0: i32, %arg1: i32, %arg2: i32, %arg3: memref<256x128xbf16, #tpu.memory_space<vmem>>, %arg4: memref<128x128xbf16, #tpu.memory_space<vmem>>, %arg5: memref<1x128xf32, #tpu.memory_space<vmem>>, %arg6: memref<1x128xf32, #tpu.memory_space<vmem>>, %arg7: memref<1x128xf32, #tpu.memory_space<vmem>>, %arg8: memref<256x128xf32, #tpu.memory_space<vmem>>, %arg9: memref<256x128xf32, #tpu.memory_space<vmem>>) attributes {dimension_semantics = [#tpu.dimension_semantics<parallel>, #tpu.dimension_semantics<parallel>, #tpu.dimension_semantics<arbitrary>], iteration_bounds = array<i64: 2, 1, 1>, scalar_prefetch = 0 : i64, scratch_operands = 1 : i64, tpu.core_type = #tpu.core_type<tc>, window_params = [{transform_indices = @transform_0, window_bounds = array<i64: 256, 128>}, {transform_indices = @transform_1, window_bounds = array<i64: 128, 128>}, {transform_indices = @transform_2, window_bounds = array<i64: 1, 128>}, {transform_indices = @transform_3, window_bounds = array<i64: 1, 128>}, {transform_indices = @transform_4, window_bounds = array<i64: 1, 128>}, {transform_indices = @transform_5, window_bounds = array<i64: 256, 128>}]} {
    %c0_i32 = arith.constant 0 : i32
    %0 = arith.cmpi eq, %arg2, %c0_i32 : i32
    %1 = arith.extui %0 : i1 to i32
    %c0_i32_0 = arith.constant 0 : i32
    %2 = arith.cmpi ne, %1, %c0_i32_0 : i32
    scf.if %2 {
      %cst_10 = arith.constant 0.000000e+00 : f32
      %12 = vector.broadcast %cst_10 : f32 to vector<256x128xf32>
      %c0_11 = arith.constant 0 : index
      %c0_12 = arith.constant 0 : index
      %13 = vector.load %arg9[%c0_11, %c0_12] : memref<256x128xf32, #tpu.memory_space<vmem>>, vector<256x128xf32>
      tpu.vector_store %arg9[%c0_11, %c0_12], %12 {strides = array<i32>} : memref<256x128xf32, #tpu.memory_space<vmem>>, vector<256x128xf32>,
    } else {
    }
    %c0 = arith.constant 0 : index
    %c0_1 = arith.constant 0 : index
    %3 = vector.load %arg9[%c0, %c0_1] : memref<256x128xf32, #tpu.memory_space<vmem>>, vector<256x128xf32>
    %c0_2 = arith.constant 0 : index
    %c0_3 = arith.constant 0 : index
    %4 = vector.load %arg3[%c0_2, %c0_3] : memref<256x128xbf16, #tpu.memory_space<vmem>>, vector<256x128xbf16>
    %c0_4 = arith.constant 0 : index
    %c0_5 = arith.constant 0 : index
    %5 = vector.load %arg4[%c0_4, %c0_5] : memref<128x128xbf16, #tpu.memory_space<vmem>>, vector<128x128xbf16>
    %cst = arith.constant dense<0.000000e+00> : vector<256x128xf32>
    %6 = tpu.matmul %4, %5, %cst {dimension_numbers = #tpu.dot_dimension_numbers<[1], [0], [0], [1], [0, 0, 1, 1], [], []>} : vector<256x128xbf16>, vector<128x128xbf16>, vector<256x128xf32> -> vector<256x128xf32>
    %7 = arith.addf %3, %6 : vector<256x128xf32>
    %c0_6 = arith.constant 0 : index
    %c0_7 = arith.constant 0 : index
    %8 = vector.load %arg9[%c0_6, %c0_7] : memref<256x128xf32, #tpu.memory_space<vmem>>, vector<256x128xf32>
    tpu.vector_store %arg9[%c0_6, %c0_7], %7 {strides = array<i32>} : memref<256x128xf32, #tpu.memory_space<vmem>>, vector<256x128xf32>,
    %c0_i32_8 = arith.constant 0 : i32
    %9 = arith.cmpi eq, %arg2, %c0_i32_8 : i32
    %10 = arith.extui %9 : i1 to i32
    %c0_i32_9 = arith.constant 0 : i32
    %11 = arith.cmpi ne, %10, %c0_i32_9 : i32
    scf.if %11 {
      %c0_10 = arith.constant 0 : index
      %c0_11 = arith.constant 0 : index
      %12 = vector.load %arg9[%c0_10, %c0_11] : memref<256x128xf32, #tpu.memory_space<vmem>>, vector<256x128xf32>
      %c0_12 = arith.constant 0 : index
      %c0_13 = arith.constant 0 : index
      %13 = vector.load %arg5[%c0_12, %c0_13] : memref<1x128xf32, #tpu.memory_space<vmem>>, vector<1x128xf32>
      %14 = vector.broadcast %13 : vector<1x128xf32> to vector<256x128xf32>
      %15 = arith.addf %12, %14 : vector<256x128xf32>
      %16 = tpu.iota {dimensions = array<i32: 1>} : vector<256x128xi32>
      %c96_i32 = arith.constant 96 : i32
      %17 = vector.broadcast %c96_i32 : i32 to vector<256x128xi32>
      %18 = arith.cmpi slt, %16, %17 : vector<256x128xi32>
      %cst_14 = arith.constant 0.000000e+00 : f32
      %19 = vector.broadcast %cst_14 : f32 to vector<256x128xf32>
      %20 = arith.select %18, %15, %19 : vector<256x128xi1>, vector<256x128xf32>
      %cst_15 = arith.constant dense<0.000000e+00> : vector<256xf32>
      %21 = vector.multi_reduction <add>, %20, %cst_15 [1] : vector<256x128xf32> to vector<256xf32>
      %22 = vector.shape_cast %21 : vector<256xf32> to vector<256x1xf32>
      %cst_16 = arith.constant 0.010416667 : f32
      %23 = vector.broadcast %cst_16 : f32 to vector<256x1xf32>
      %24 = arith.mulf %22, %23 : vector<256x1xf32>
      %25 = vector.broadcast %24 : vector<256x1xf32> to vector<256x128xf32>
      %26 = arith.subf %15, %25 : vector<256x128xf32>
      %cst_17 = arith.constant 0.000000e+00 : f32
      %27 = vector.broadcast %cst_17 : f32 to vector<256x128xf32>
      %28 = arith.select %18, %26, %27 : vector<256x128xi1>, vector<256x128xf32>
      %29 = arith.mulf %28, %28 : vector<256x128xf32>
      %cst_18 = arith.constant dense<0.000000e+00> : vector<256xf32>
      %30 = vector.multi_reduction <add>, %29, %cst_18 [1] : vector<256x128xf32> to vector<256xf32>
      %31 = vector.shape_cast %30 : vector<256xf32> to vector<256x1xf32>
      %cst_19 = arith.constant 0.010416667 : f32
      %32 = vector.broadcast %cst_19 : f32 to vector<256x1xf32>
      %33 = arith.mulf %31, %32 : vector<256x1xf32>
      %cst_20 = arith.constant 9.99999974E-6 : f32
      %34 = vector.broadcast %cst_20 : f32 to vector<256x1xf32>
      %35 = arith.addf %33, %34 : vector<256x1xf32>
      %36 = math.rsqrt %35 : vector<256x1xf32>
      %37 = vector.broadcast %36 : vector<256x1xf32> to vector<256x128xf32>
      %38 = arith.mulf %28, %37 : vector<256x128xf32>
      %c0_21 = arith.constant 0 : index
      %c0_22 = arith.constant 0 : index
      %39 = vector.load %arg6[%c0_21, %c0_22] : memref<1x128xf32, #tpu.memory_space<vmem>>, vector<1x128xf32>
      %40 = vector.broadcast %39 : vector<1x128xf32> to vector<256x128xf32>
      %41 = arith.mulf %38, %40 : vector<256x128xf32>
      %c0_23 = arith.constant 0 : index
      %c0_24 = arith.constant 0 : index
      %42 = vector.load %arg7[%c0_23, %c0_24] : memref<1x128xf32, #tpu.memory_space<vmem>>, vector<1x128xf32>
      %43 = vector.broadcast %42 : vector<1x128xf32> to vector<256x128xf32>
      %44 = arith.addf %41, %43 : vector<256x128xf32>
      %c0_25 = arith.constant 0 : index
      %c0_26 = arith.constant 0 : index
      %45 = vector.load %arg8[%c0_25, %c0_26] : memref<256x128xf32, #tpu.memory_space<vmem>>, vector<256x128xf32>
      tpu.vector_store %arg8[%c0_25, %c0_26], %44 {strides = array<i32>} : memref<256x128xf32, #tpu.memory_space<vmem>>, vector<256x128xf32>,
    } else {
    }
    return
  }
  func.func @transform_0(%arg0: i32, %arg1: i32, %arg2: i32) -> (i32, i32) {
    %c0_i32 = arith.constant 0 : i32
    return %arg0, %arg2 : i32, i32
  }
  func.func @transform_1(%arg0: i32, %arg1: i32, %arg2: i32) -> (i32, i32) {
    %c0_i32 = arith.constant 0 : i32
    return %arg2, %arg1 : i32, i32
  }
  func.func @transform_2(%arg0: i32, %arg1: i32, %arg2: i32) -> (i32, i32) {
    %c0_i32 = arith.constant 0 : i32
    %c0_i32_0 = arith.constant 0 : i32
    return %c0_i32, %arg1 : i32, i32
  }
  func.func @transform_3(%arg0: i32, %arg1: i32, %arg2: i32) -> (i32, i32) {
    %c0_i32 = arith.constant 0 : i32
    %c0_i32_0 = arith.constant 0 : i32
    return %c0_i32, %arg1 : i32, i32
  }
  func.func @transform_4(%arg0: i32, %arg1: i32, %arg2: i32) -> (i32, i32) {
    %c0_i32 = arith.constant 0 : i32
    %c0_i32_0 = arith.constant 0 : i32
    return %c0_i32, %arg1 : i32, i32
  }
  func.func @transform_5(%arg0: i32, %arg1: i32, %arg2: i32) -> (i32, i32) {
    %c0_i32 = arith.constant 0 : i32
    return %arg0, %arg1 : i32, i32
  }
}

</mosaic_0001>

<llo_original>
// kernel: run.1
$region0: #{run.1}
  #allocation0 [shape = 'u32[]', space=smem, size = 0x4, offset = 0x4, fixed_abs, tag = 'smem constant byte address 0x4 - core index']
  #allocation1 [shape = 'u32[144,128]{1,0:T(1,128)}', space=vmem, size = 0x12000, scoped, tag = 'internal scratch']
  #allocation2 [shape = 'f32[256,128]{1,0:T(8,128)}', space=vmem, size = 0x20000, scoped, tag = 'scratch operand']
  %s0 = inlined_call_operand.vmem [shape: bf16[512,128], index: 0, kind: input, shape index: {}]
  %s1 = inlined_call_operand.vmem [shape: bf16[128,128], index: 1, kind: input, shape index: {}]
  %s2 = inlined_call_operand.vmem [shape: f32[1,128], index: 2, kind: input, shape index: {}]
  %s3 = inlined_call_operand.vmem [shape: f32[1,128], index: 3, kind: input, shape index: {}]
  %s4 = inlined_call_operand.vmem [shape: f32[1,128], index: 4, kind: input, shape index: {}]
  %s5 = inlined_call_operand.vmem [shape: f32[512,128], index: 5, kind: output, shape index: {}]
  %s6 = sld [smem:[#allocation0]]
  $region61: #{run.1} parent=0
    _
  %s8 = ssub.s32 1, %s6
  %s9 = scalar_select 0, %s8, %s6
  loop: start=0, step=1, limit=4
  $region2: #{run.1} parent=0 // loop_pre_header
    _
  $region3: #{run.1} parent=0 // loop_header
    %s11 = sphi 0, %s15
    %p12 = scmp.ge.s32.totalorder %s11, 4
    %s18 = sphi 0, %s37
    %s19 = sphi 0, %s33
    %s20 = sphi 0, %s29
    %s21 = sphi 0, %s18
    %s22 = sphi 0, %s19
    %s23 = sphi 0, %s20
    %s24 = sphi 0, %s21
    %s25 = sphi 0, %s22
    %s26 = sphi 0, %s23
    %s42 = sphi 0, %s44
    %s45 = sphi 0, %s42
    %s46 = sphi 0, %s45
    %s62 = sphi 0, %s46
    %s70 = sphi 0, %s72
    %s73 = sphi 0, %s70
    %s74 = sphi 0, %s73
    %s90 = sphi 0, %s74
    %s96 = sphi 0, %s98
    %s99 = sphi 0, %s96
    %s100 = sphi 0, %s99
    %s116 = sphi 0, %s100
    %s122 = sphi 0, %s124
    %s125 = sphi 0, %s122
    %s126 = sphi 0, %s125
    %s142 = sphi 0, %s126
    %s148 = sphi 0, %s150
    %s151 = sphi 0, %s148
    %s152 = sphi 0, %s151
    %s168 = sphi 0, %s152
    %s176 = sphi 0, %s178
    %s179 = sphi 0, %s176
    %s180 = sphi 0, %s179
    %s196 = sphi 0, %s180
  $region4: #{run.1} parent=0 // loop_header_branch
    %14 = sbr.rel (%p12) target = $region8
  $region5: #{run.1} parent=0 // loop_body
    %s16 = ssub.s32 %s11, 1
    %s17 = ssub.s32 %s11, 2
    %s27 = sadd.s32 1, %s20
    %p28 = scmp.ge.s32.totalorder %s27, 1
    %s29 = scalar_select %p28, 0, %s27
    %s30 = sadd.s32 1, %s19
    %s31 = scalar_select %p28, %s30, %s19
    %p32 = scmp.ge.s32.totalorder %s31, 1
    %s33 = scalar_select %p32, 0, %s31
    %s34 = sadd.s32 1, %s18
    %s35 = scalar_select %p32, %s34, %s18
    %p36 = scmp.ge.s32.totalorder %s35, 2
    %s37 = scalar_select %p36, 0, %s35
    %s38 = ssub.s32 %s18, %s37
    %s39 = ssub.s32 %s20, %s29
    %s40 = sor.u32 %s38, %s39
    %p41 = scmp.eq.s32.totalorder %s40, 0
    %s43 = sadd.s32 %s42, 1
    %s44 = scalar_select %p41, %s42, %s43
    %p47 = pneg %p41
    %p48 = scmp.eq.s32.totalorder %s11, 1
    %p49 = por %p47, %p48
    %p50 = scmp.ne.s32.totalorder %s42, %s45
    %p51 = scmp.eq.s32.totalorder %s11, 0
    %p52 = por %p50, %p51
    %p53 = scmp.ne.s32.totalorder %s42, %s45
    %p54 = scmp.eq.s32.totalorder %s16, 1
    %p55 = por %p53, %p54
    %p56 = scmp.ne.s32.totalorder %s45, %s46
    %p57 = scmp.eq.s32.totalorder %s16, 0
    %p58 = por %p56, %p57
    %p59 = scmp.ne.s32.totalorder %s45, %s46
    %p60 = scmp.eq.s32.totalorder %s17, 1
    %p61 = por %p59, %p60
    %p63 = scmp.ne.s32.totalorder %s46, %s62
    %p64 = scmp.eq.s32.totalorder %s17, 0
    %p65 = por %p63, %p64
    %s66 = ssub.s32 %s20, %s29
    %s67 = ssub.s32 %s19, %s33
    %s68 = sor.u32 %s66, %s67
    %p69 = scmp.eq.s32.totalorder %s68, 0
    %s71 = sadd.s32 %s70, 1
    %s72 = scalar_select %p69, %s70, %s71
    %p75 = pneg %p69
    %p76 = scmp.eq.s32.totalorder %s11, 1
    %p77 = por %p75, %p76
    %p78 = scmp.ne.s32.totalorder %s70, %s73
    %p79 = scmp.eq.s32.totalorder %s11, 0
    %p80 = por %p78, %p79
    %p81 = scmp.ne.s32.totalorder %s70, %s73
    %p82 = scmp.eq.s32.totalorder %s16, 1
    %p83 = por %p81, %p82
    %p84 = scmp.ne.s32.totalorder %s73, %s74
    %p85 = scmp.eq.s32.totalorder %s16, 0
    %p86 = por %p84, %p85
    %p87 = scmp.ne.s32.totalorder %s73, %s74
    %p88 = scmp.eq.s32.totalorder %s17, 1
    %p89 = por %p87, %p88
    %p91 = scmp.ne.s32.totalorder %s74, %s90
    %p92 = scmp.eq.s32.totalorder %s17, 0
    %p93 = por %p91, %p92
    %s94 = ssub.s32 %s19, %s33
    %p95 = scmp.eq.s32.totalorder %s94, 0
    %s97 = sadd.s32 %s96, 1
    %s98 = scalar_select %p95, %s96, %s97
    %p101 = pneg %p95
    %p102 = scmp.eq.s32.totalorder %s11, 1
    %p103 = por %p101, %p102
    %p104 = scmp.ne.s32.totalorder %s96, %s99
    %p105 = scmp.eq.s32.totalorder %s11, 0
    %p106 = por %p104, %p105
    %p107 = scmp.ne.s32.totalorder %s96, %s99
    %p108 = scmp.eq.s32.totalorder %s16, 1
    %p109 = por %p107, %p108
    %p110 = scmp.ne.s32.totalorder %s99, %s100
    %p111 = scmp.eq.s32.totalorder %s16, 0
    %p112 = por %p110, %p111
    %p113 = scmp.ne.s32.totalorder %s99, %s100
    %p114 = scmp.eq.s32.totalorder %s17, 1
    %p115 = por %p113, %p114
    %p117 = scmp.ne.s32.totalorder %s100, %s116
    %p118 = scmp.eq.s32.totalorder %s17, 0
    %p119 = por %p117, %p118
    %s120 = ssub.s32 %s19, %s33
    %p121 = scmp.eq.s32.totalorder %s120, 0
    %s123 = sadd.s32 %s122, 1
    %s124 = scalar_select %p121, %s122, %s123
    %p127 = pneg %p121
    %p128 = scmp.eq.s32.totalorder %s11, 1
    %p129 = por %p127, %p128
    %p130 = scmp.ne.s32.totalorder %s122, %s125
    %p131 = scmp.eq.s32.totalorder %s11, 0
    %p132 = por %p130, %p131
    %p133 = scmp.ne.s32.totalorder %s122, %s125
    %p134 = scmp.eq.s32.totalorder %s16, 1
    %p135 = por %p133, %p134
    %p136 = scmp.ne.s32.totalorder %s125, %s126
    %p137 = scmp.eq.s32.totalorder %s16, 0
    %p138 = por %p136, %p137
    %p139 = scmp.ne.s32.totalorder %s125, %s126
    %p140 = scmp.eq.s32.totalorder %s17, 1
    %p141 = por %p139, %p140
    %p143 = scmp.ne.s32.totalorder %s126, %s142
    %p144 = scmp.eq.s32.totalorder %s17, 0
    %p145 = por %p143, %p144
    %s146 = ssub.s32 %s19, %s33
    %p147 = scmp.eq.s32.totalorder %s146, 0
    %s149 = sadd.s32 %s148, 1
    %s150 = scalar_select %p147, %s148, %s149
    %p153 = pneg %p147
    %p154 = scmp.eq.s32.totalorder %s11, 1
    %p155 = por %p153, %p154
    %p156 = scmp.ne.s32.totalorder %s148, %s151
    %p157 = scmp.eq.s32.totalorder %s11, 0
    %p158 = por %p156, %p157
    %p159 = scmp.ne.s32.totalorder %s148, %s151
    %p160 = scmp.eq.s32.totalorder %s16, 1
    %p161 = por %p159, %p160
    %p162 = scmp.ne.s32.totalorder %s151, %s152
    %p163 = scmp.eq.s32.totalorder %s16, 0
    %p164 = por %p162, %p163
    %p165 = scmp.ne.s32.totalorder %s151, %s152
    %p166 = scmp.eq.s32.totalorder %s17, 1
    %p167 = por %p165, %p166
    %p169 = scmp.ne.s32.totalorder %s152, %s168
    %p170 = scmp.eq.s32.totalorder %s17, 0
    %p171 = por %p169, %p170
    %s172 = ssub.s32 %s18, %s37
    %s173 = ssub.s32 %s19, %s33
    %s174 = sor.u32 %s172, %s173
    %p175 = scmp.eq.s32.totalorder %s174, 0
    %s177 = sadd.s32 %s176, 1
    %s178 = scalar_select %p175, %s176, %s177
    %p181 = pneg %p175
    %p182 = scmp.eq.s32.totalorder %s11, 1
    %p183 = por %p181, %p182
    %p184 = scmp.ne.s32.totalorder %s176, %s179
    %p185 = scmp.eq.s32.totalorder %s11, 0
    %p186 = por %p184, %p185
    %p187 = scmp.ne.s32.totalorder %s176, %s179
    %p188 = scmp.eq.s32.totalorder %s16, 1
    %p189 = por %p187, %p188
    %p190 = scmp.ne.s32.totalorder %s179, %s180
    %p191 = scmp.eq.s32.totalorder %s16, 0
    %p192 = por %p190, %p191
    %p193 = scmp.ne.s32.totalorder %s179, %s180
    %p194 = scmp.eq.s32.totalorder %s17, 1
    %p195 = por %p193, %p194
    %p197 = scmp.ne.s32.totalorder %s180, %s196
    %p198 = scmp.eq.s32.totalorder %s17, 0
    %p199 = por %p197, %p198
    %p200 = scmp.le.s32.totalorder 1, %s11
    %p201 = scmp.lt.s32.totalorder %s11, 3
    %p202 = pnand %p200, %p201
    %p203 = pneg %p202
    // Predicated region
    $region9: #{run.1} parent=5 // pred_check
      _
    $region10: #{run.1} parent=5 // pred_check_branch
      %205 = sbr.rel (%p202) target = $region12
    $region11: #{run.1} parent=5 // pred_region
      %s206 = ssub.s32 %s11, 1
      // Predicated region
      $region13: #{run.1} parent=11 // pred_check
        %p207 = pneg %p86
      $region14: #{run.1} parent=11 // pred_check_branch
        %209 = sbr.rel (%p207) target = $region16
      $region15: #{run.1} parent=11 // pred_region
        %s210 = smul.u32 16, %s23
        %p211 = scmp.lt.s32.totalorder %s210, 15
        %s212 = scalar_select %p211, %s210, 15
        %p213 = scmp.lt.s32.totalorder %s22, 0
        %s214 = scalar_select %p213, %s22, 0
        %s215 = sadd.s32 %s214, %s212
        %s216 = smul.addr %s215, 4
        %s217 = scalar_lea.vmem %s1, %s216
        %s218 = smul.u32 16, %s23
      $region16: #{run.1} parent=11 // pred_fallthru
        _
      // Predicated region
      $region17: #{run.1} parent=11 // pred_check
        %p219 = pneg %p112
      $region18: #{run.1} parent=11 // pred_check_branch
        %221 = sbr.rel (%p219) target = $region20
      $region19: #{run.1} parent=11 // pred_region
        %p222 = scmp.lt.s32.totalorder %s22, 0
        %s223 = scalar_select %p222, %s22, 0
        %s224 = scalar_lea.vmem %s2, %s223
      $region20: #{run.1} parent=11 // pred_fallthru
        _
      // Predicated region
      $region21: #{run.1} parent=11 // pred_check
        %p225 = pneg %p138
      $region22: #{run.1} parent=11 // pred_check_branch
        %227 = sbr.rel (%p225) target = $region24
      $region23: #{run.1} parent=11 // pred_region
        %p228 = scmp.lt.s32.totalorder %s22, 0
        %s229 = scalar_select %p228, %s22, 0
        %s230 = scalar_lea.vmem %s3, %s229
      $region24: #{run.1} parent=11 // pred_fallthru
        _
      // Predicated region
      $region25: #{run.1} parent=11 // pred_check
        %p231 = pneg %p164
      $region26: #{run.1} parent=11 // pred_check_branch
        %233 = sbr.rel (%p231) target = $region28
      $region27: #{run.1} parent=11 // pred_region
        %p234 = scmp.lt.s32.totalorder %s22, 0
        %s235 = scalar_select %p234, %s22, 0
        %s236 = scalar_lea.vmem %s4, %s235
      $region28: #{run.1} parent=11 // pred_fallthru
        _
    $region12: #{run.1} parent=5 // pred_fallthru
      _
    %p237 = scmp.lt.s32.totalorder %s11, 2
    // Predicated region
    $region29: #{run.1} parent=5 // pred_check
      %p238 = pneg %p237
    $region30: #{run.1} parent=5 // pred_check_branch
      %240 = sbr.rel (%p238) target = $region32
    $region31: #{run.1} parent=5 // pred_region
      // Predicated region
      $region33: #{run.1} parent=31 // pred_check
        %p241 = pneg %p52
      $region34: #{run.1} parent=31 // pred_check_branch
        %243 = sbr.rel (%p241) target = $region36
      $region35: #{run.1} parent=31 // pred_region
        %s244 = smul.u32 32, %s18
        %p245 = scmp.lt.s32.totalorder %s244, 63
        %s246 = scalar_select %p245, %s244, 63
        %p247 = scmp.lt.s32.totalorder %s20, 0
        %s248 = scalar_select %p247, %s20, 0
        %s249 = sadd.s32 %s248, %s246
        %s250 = smul.addr %s249, 4
        %s251 = scalar_lea.vmem %s0, %s250
        %s252 = smul.u32 32, %s18
      $region36: #{run.1} parent=31 // pred_fallthru
        _
    $region32: #{run.1} parent=5 // pred_fallthru
      _
    %p253 = scmp.le.s32.totalorder 1, %s11
    %p254 = scmp.lt.s32.totalorder %s11, 3
    %p255 = pnand %p253, %p254
    %p256 = pneg %p255
    // Predicated region
    $region37: #{run.1} parent=5 // pred_check
      _
    $region38: #{run.1} parent=5 // pred_check_branch
      %258 = sbr.rel (%p255) target = $region40
    $region39: #{run.1} parent=5 // pred_region
      %s259 = ssub.s32 %s11, 1
      %s260 = smul.u32 32, %s21
      %p261 = scmp.lt.s32.totalorder %s260, 63
      %s262 = scalar_select %p261, %s260, 63
      %p263 = scmp.lt.s32.totalorder %s23, 0
      %s264 = scalar_select %p263, %s23, 0
      %s265 = sadd.s32 %s264, %s262
      %s266 = smul.addr %s265, 4
      %s267 = scalar_lea.vmem %s0, %s266
      %p268 = pneg %p58
      %p269 = pneg %p55
      %s270 = smul.u32 16, %s23
      %p271 = scmp.lt.s32.totalorder %s270, 15
      %s272 = scalar_select %p271, %s270, 15
      %p273 = scmp.lt.s32.totalorder %s22, 0
      %s274 = scalar_select %p273, %s22, 0
      %s275 = sadd.s32 %s274, %s272
      %s276 = smul.addr %s275, 4
      %s277 = scalar_lea.vmem %s1, %s276
      %p278 = pneg %p86
      %p279 = pneg %p83
      %p280 = scmp.lt.s32.totalorder %s22, 0
      %s281 = scalar_select %p280, %s22, 0
      %s282 = scalar_lea.vmem %s2, %s281
      %p283 = pneg %p112
      %p284 = pneg %p109
      %p285 = scmp.lt.s32.totalorder %s22, 0
      %s286 = scalar_select %p285, %s22, 0
      %s287 = scalar_lea.vmem %s3, %s286
      %p288 = pneg %p138
      %p289 = pneg %p135
      %p290 = scmp.lt.s32.totalorder %s22, 0
      %s291 = scalar_select %p290, %s22, 0
      %s292 = scalar_lea.vmem %s4, %s291
      %p293 = pneg %p164
      %p294 = pneg %p161
      %p295 = pneg %p192
      %p296 = pneg %p189
      %s297 = smul.u32 32, %s21
      %p298 = scmp.lt.s32.totalorder %s297, 63
      %s299 = scalar_select %p298, %s297, 63
      %p300 = scmp.lt.s32.totalorder %s22, 0
      %s301 = scalar_select %p300, %s22, 0
      %s302 = sadd.s32 %s301, %s299
      %s303 = smul.addr %s302, 8
      %s304 = scalar_lea.vmem %s5, %s303
      %s305 = smul.u32 32, %s21
      %p306 = scmp.lt.s32.totalorder %s305, 63
      %s307 = scalar_select %p306, %s305, 63
      %p308 = scmp.lt.s32.totalorder %s23, 0
      %s309 = scalar_select %p308, %s23, 0
      %s310 = sadd.s32 %s309, %s307
      %s311 = smul.addr %s310, 4
      %s312 = scalar_lea.vmem %s0, %s311
      %s313 = smul.u32 32, %s21
      %s314 = smul.u32 16, %s23
      %p315 = scmp.lt.s32.totalorder %s314, 15
      %s316 = scalar_select %p315, %s314, 15
      %p317 = scmp.lt.s32.totalorder %s22, 0
      %s318 = scalar_select %p317, %s22, 0
      %s319 = sadd.s32 %s318, %s316
      %s320 = smul.addr %s319, 4
      %s321 = scalar_lea.vmem %s1, %s320
      %s322 = smul.u32 16, %s23
      %p323 = scmp.lt.s32.totalorder %s22, 0
      %s324 = scalar_select %p323, %s22, 0
      %s325 = scalar_lea.vmem %s2, %s324
      %p326 = scmp.lt.s32.totalorder %s22, 0
      %s327 = scalar_select %p326, %s22, 0
      %s328 = scalar_lea.vmem %s3, %s327
      %p329 = scmp.lt.s32.totalorder %s22, 0
      %s330 = scalar_select %p329, %s22, 0
      %s331 = scalar_lea.vmem %s4, %s330
      %s332 = smul.u32 32, %s21
      %p333 = scmp.lt.s32.totalorder %s332, 63
      %s334 = scalar_select %p333, %s332, 63
      %p335 = scmp.lt.s32.totalorder %s22, 0
      %s336 = scalar_select %p335, %s22, 0
      %s337 = sadd.s32 %s336, %s334
      %s338 = smul.addr %s337, 8
      %s339 = scalar_lea.vmem %s5, %s338
      %s340 = smul.u32 32, %s21
      %p342 = scmp.eq.s32.totalorder %s23, 0
      // Predicated region
      $region41: #{run.1} parent=39 // pred_check
        %p343 = pneg %p342
      $region42: #{run.1} parent=39 // pred_check_branch
        %345 = sbr.rel (%p343) target = $region44
      $region43: #{run.1} parent=39 // pred_region
        %346 = vst [vmem:[#allocation2] sm:$0xff] 0.0
        %347 = vst [vmem:[#allocation2 + $0x8] sm:$0xff] 0.0
        %348 = vst [vmem:[#allocation2 + $0x10] sm:$0xff] 0.0
        %349 = vst [vmem:[#allocation2 + $0x18] sm:$0xff] 0.0
        %350 = vst [vmem:[#allocation2 + $0x20] sm:$0xff] 0.0
        %351 = vst [vmem:[#allocation2 + $0x28] sm:$0xff] 0.0
        %352 = vst [vmem:[#allocation2 + $0x30] sm:$0xff] 0.0
        %353 = vst [vmem:[#allocation2 + $0x38] sm:$0xff] 0.0
        %354 = vst [vmem:[#allocation2 + $0x40] sm:$0xff] 0.0
        %355 = vst [vmem:[#allocation2 + $0x48] sm:$0xff] 0.0
        %356 = vst [vmem:[#allocation2 + $0x50] sm:$0xff] 0.0
        %357 = vst [vmem:[#allocation2 + $0x58] sm:$0xff] 0.0
        %358 = vst [vmem:[#allocation2 + $0x60] sm:$0xff] 0.0
        %359 = vst [vmem:[#allocation2 + $0x68] sm:$0xff] 0.0
        %360 = vst [vmem:[#allocation2 + $0x70] sm:$0xff] 0.0
        %361 = vst [vmem:[#allocation2 + $0x78] sm:$0xff] 0.0
        %362 = vst [vmem:[#allocation2 + $0x80] sm:$0xff] 0.0
        %363 = vst [vmem:[#allocation2 + $0x88] sm:$0xff] 0.0
        %364 = vst [vmem:[#allocation2 + $0x90] sm:$0xff] 0.0
        %365 = vst [vmem:[#allocation2 + $0x98] sm:$0xff] 0.0
        %366 = vst [vmem:[#allocation2 + $0xa0] sm:$0xff] 0.0
        %367 = vst [vmem:[#allocation2 + $0xa8] sm:$0xff] 0.0
        %368 = vst [vmem:[#allocation2 + $0xb0] sm:$0xff] 0.0
        %369 = vst [vmem:[#allocation2 + $0xb8] sm:$0xff] 0.0
        %370 = vst [vmem:[#allocation2 + $0xc0] sm:$0xff] 0.0
        %371 = vst [vmem:[#allocation2 + $0xc8] sm:$0xff] 0.0
        %372 = vst [vmem:[#allocation2 + $0xd0] sm:$0xff] 0.0
        %373 = vst [vmem:[#allocation2 + $0xd8] sm:$0xff] 0.0
        %374 = vst [vmem:[#allocation2 + $0xe0] sm:$0xff] 0.0
        %375 = vst [vmem:[#allocation2 + $0xe8] sm:$0xff] 0.0
        %376 = vst [vmem:[#allocation2 + $0xf0] sm:$0xff] 0.0
        %377 = vst [vmem:[#allocation2 + $0xf8] sm:$0xff] 0.0
      $region44: #{run.1} parent=39 // pred_fallthru
        _
      %v378 = vld [vmem:[#allocation2] sm:$0xff]
      %v379 = vld [vmem:[#allocation2 + $0x8] sm:$0xff]
      %v380 = vld [vmem:[#allocation2 + $0x10] sm:$0xff]
      %v381 = vld [vmem:[#allocation2 + $0x18] sm:$0xff]
      %v382 = vld [vmem:[#allocation2 + $0x20] sm:$0xff]
      %v383 = vld [vmem:[#allocation2 + $0x28] sm:$0xff]
      %v384 = vld [vmem:[#allocation2 + $0x30] sm:$0xff]
      %v385 = vld [vmem:[#allocation2 + $0x38] sm:$0xff]
      %v386 = vld [vmem:[#allocation2 + $0x40] sm:$0xff]
      %v387 = vld [vmem:[#allocation2 + $0x48] sm:$0xff]
      %v388 = vld [vmem:[#allocation2 + $0x50] sm:$0xff]
      %v389 = vld [vmem:[#allocation2 + $0x58] sm:$0xff]
      %v390 = vld [vmem:[#allocation2 + $0x60] sm:$0xff]
      %v391 = vld [vmem:[#allocation2 + $0x68] sm:$0xff]
      %v392 = vld [vmem:[#allocation2 + $0x70] sm:$0xff]
      %v393 = vld [vmem:[#allocation2 + $0x78] sm:$0xff]
      %v394 = vld [vmem:[#allocation2 + $0x80] sm:$0xff]
      %v395 = vld [vmem:[#allocation2 + $0x88] sm:$0xff]
      %v396 = vld [vmem:[#allocation2 + $0x90] sm:$0xff]
      %v397 = vld [vmem:[#allocation2 + $0x98] sm:$0xff]
      %v398 = vld [vmem:[#allocation2 + $0xa0] sm:$0xff]
      %v399 = vld [vmem:[#allocation2 + $0xa8] sm:$0xff]
      %v400 = vld [vmem:[#allocation2 + $0xb0] sm:$0xff]
      %v401 = vld [vmem:[#allocation2 + $0xb8] sm:$0xff]
      %v402 = vld [vmem:[#allocation2 + $0xc0] sm:$0xff]
      %v403 = vld [vmem:[#allocation2 + $0xc8] sm:$0xff]
      %v404 = vld [vmem:[#allocation2 + $0xd0] sm:$0xff]
      %v405 = vld [vmem:[#allocation2 + $0xd8] sm:$0xff]
      %v406 = vld [vmem:[#allocation2 + $0xe0] sm:$0xff]
      %v407 = vld [vmem:[#allocation2 + $0xe8] sm:$0xff]
      %v408 = vld [vmem:[#allocation2 + $0xf0] sm:$0xff]
      %v409 = vld [vmem:[#allocation2 + $0xf8] sm:$0xff]
      %v410 = vld [vmem:[%s312] sm:$0xf]
      %v411 = vld [vmem:[%s312 + $0x4] sm:$0xf]
      %v412 = vld [vmem:[%s312 + $0x8] sm:$0xf]
      %v413 = vld [vmem:[%s312 + $0xc] sm:$0xf]
      %v414 = vld [vmem:[%s312 + $0x10] sm:$0xf]
      %v415 = vld [vmem:[%s312 + $0x14] sm:$0xf]
      %v416 = vld [vmem:[%s312 + $0x18] sm:$0xf]
      %v417 = vld [vmem:[%s312 + $0x1c] sm:$0xf]
      %v418 = vld [vmem:[%s312 + $0x20] sm:$0xf]
      %v419 = vld [vmem:[%s312 + $0x24] sm:$0xf]
      %v420 = vld [vmem:[%s312 + $0x28] sm:$0xf]
      %v421 = vld [vmem:[%s312 + $0x2c] sm:$0xf]
      %v422 = vld [vmem:[%s312 + $0x30] sm:$0xf]
      %v423 = vld [vmem:[%s312 + $0x34] sm:$0xf]
      %v424 = vld [vmem:[%s312 + $0x38] sm:$0xf]
      %v425 = vld [vmem:[%s312 + $0x3c] sm:$0xf]
      %v426 = vld [vmem:[%s312 + $0x40] sm:$0xf]
      %v427 = vld [vmem:[%s312 + $0x44] sm:$0xf]
      %v428 = vld [vmem:[%s312 + $0x48] sm:$0xf]
      %v429 = vld [vmem:[%s312 + $0x4c] sm:$0xf]
      %v430 = vld [vmem:[%s312 + $0x50] sm:$0xf]
      %v431 = vld [vmem:[%s312 + $0x54] sm:$0xf]
      %v432 = vld [vmem:[%s312 + $0x58] sm:$0xf]
      %v433 = vld [vmem:[%s312 + $0x5c] sm:$0xf]
      %v434 = vld [vmem:[%s312 + $0x60] sm:$0xf]
      %v435 = vld [vmem:[%s312 + $0x64] sm:$0xf]
      %v436 = vld [vmem:[%s312 + $0x68] sm:$0xf]
      %v437 = vld [vmem:[%s312 + $0x6c] sm:$0xf]
      %v438 = vld [vmem:[%s312 + $0x70] sm:$0xf]
      %v439 = vld [vmem:[%s312 + $0x74] sm:$0xf]
      %v440 = vld [vmem:[%s312 + $0x78] sm:$0xf]
      %v441 = vld [vmem:[%s312 + $0x7c] sm:$0xf]
      %v442 = vld [vmem:[%s321] sm:$0xf]
      %v443 = vld [vmem:[%s321 + $0x4] sm:$0xf]
      %v444 = vld [vmem:[%s321 + $0x8] sm:$0xf]
      %v445 = vld [vmem:[%s321 + $0xc] sm:$0xf]
      %v446 = vld [vmem:[%s321 + $0x10] sm:$0xf]
      %v447 = vld [vmem:[%s321 + $0x14] sm:$0xf]
      %v448 = vld [vmem:[%s321 + $0x18] sm:$0xf]
      %v449 = vld [vmem:[%s321 + $0x1c] sm:$0xf]
      %v450 = vld [vmem:[%s321 + $0x20] sm:$0xf]
      %v451 = vld [vmem:[%s321 + $0x24] sm:$0xf]
      %v452 = vld [vmem:[%s321 + $0x28] sm:$0xf]
      %v453 = vld [vmem:[%s321 + $0x2c] sm:$0xf]
      %v454 = vld [vmem:[%s321 + $0x30] sm:$0xf]
      %v455 = vld [vmem:[%s321 + $0x34] sm:$0xf]
      %v456 = vld [vmem:[%s321 + $0x38] sm:$0xf]
      %v457 = vld [vmem:[%s321 + $0x3c] sm:$0xf]
      %v490 = vunpack.c.l.b16 %v410
      %v491 = vunpack.c.l.b16 %v411
      %v492 = vunpack.c.l.b16 %v412
      %v493 = vunpack.c.l.b16 %v413
      %v494 = vunpack.c.l.b16 %v414
      %v495 = vunpack.c.l.b16 %v415
      %v496 = vunpack.c.l.b16 %v416
      %v497 = vunpack.c.l.b16 %v417
      %v498 = vunpack.c.l.b16 %v418
      %v499 = vunpack.c.l.b16 %v419
      %v500 = vunpack.c.l.b16 %v420
      %v501 = vunpack.c.l.b16 %v421
      %v502 = vunpack.c.l.b16 %v422
      %v503 = vunpack.c.l.b16 %v423
      %v504 = vunpack.c.l.b16 %v424
      %v505 = vunpack.c.l.b16 %v425
      %v506 = vunpack.c.l.b16 %v426
      %v507 = vunpack.c.l.b16 %v427
      %v508 = vunpack.c.l.b16 %v428
      %v509 = vunpack.c.l.b16 %v429
      %v510 = vunpack.c.l.b16 %v430
      %v511 = vunpack.c.l.b16 %v431
      %v512 = vunpack.c.l.b16 %v432
      %v513 = vunpack.c.l.b16 %v433
      %v514 = vunpack.c.l.b16 %v434
      %v515 = vunpack.c.l.b16 %v435
      %v516 = vunpack.c.l.b16 %v436
      %v517 = vunpack.c.l.b16 %v437
      %v518 = vunpack.c.l.b16 %v438
      %v519 = vunpack.c.l.b16 %v439
      %v520 = vunpack.c.l.b16 %v440
      %v521 = vunpack.c.l.b16 %v441
      %v522 = vpack.c.b16 %v491, %v490
      %v523 = vpack.c.b16 %v493, %v492
      %v524 = vpack.c.b16 %v495, %v494
      %v525 = vpack.c.b16 %v497, %v496
      %v526 = vpack.c.b16 %v499, %v498
      %v527 = vpack.c.b16 %v501, %v500
      %v528 = vpack.c.b16 %v503, %v502
      %v529 = vpack.c.b16 %v505, %v504
      %v530 = vpack.c.b16 %v507, %v506
      %v531 = vpack.c.b16 %v509, %v508
      %v532 = vpack.c.b16 %v511, %v510
      %v533 = vpack.c.b16 %v513, %v512
      %v534 = vpack.c.b16 %v515, %v514
      %v535 = vpack.c.b16 %v517, %v516
      %v536 = vpack.c.b16 %v519, %v518
      %v537 = vpack.c.b16 %v521, %v520
      %v570 = vunpack.c.l.b16 %v442
      %v571 = vunpack.c.l.b16 %v443
      %v572 = vunpack.c.l.b16 %v444
      %v573 = vunpack.c.l.b16 %v445
      %v574 = vunpack.c.l.b16 %v446
      %v575 = vunpack.c.l.b16 %v447
      %v576 = vunpack.c.l.b16 %v448
      %v577 = vunpack.c.l.b16 %v449
      %v578 = vunpack.c.l.b16 %v450
      %v579 = vunpack.c.l.b16 %v451
      %v580 = vunpack.c.l.b16 %v452
      %v581 = vunpack.c.l.b16 %v453
      %v582 = vunpack.c.l.b16 %v454
      %v583 = vunpack.c.l.b16 %v455
      %v584 = vunpack.c.l.b16 %v456
      %v585 = vunpack.c.l.b16 %v457
      %v586 = vpack.c.b16 %v571, %v570
      %v587 = vpack.c.b16 %v573, %v572
      %v588 = vpack.c.b16 %v575, %v574
      %v589 = vpack.c.b16 %v577, %v576
      %v590 = vpack.c.b16 %v579, %v578
      %v591 = vpack.c.b16 %v581, %v580
      %v592 = vpack.c.b16 %v583, %v582
      %v593 = vpack.c.b16 %v585, %v584
      %602 = vmatprep.subr.bf16.mxu0 0
      %603 = vmatpush1.bf16.msra.mxu0 %v593
      %604 = vmatprep.subr.bf16.mxu0 0
      %605 = vmatpush1.bf16.msra.mxu0 %v592
      %606 = vmatprep.subr.bf16.mxu0 0
      %607 = vmatpush1.bf16.msra.mxu0 %v591
      %608 = vmatprep.subr.bf16.mxu0 0
      %609 = vmatpush1.bf16.msra.mxu0 %v590
      %610 = vmatprep.subr.bf16.mxu0 0
      %611 = vmatpush1.bf16.msra.mxu0 %v589
      %612 = vmatprep.subr.bf16.mxu0 0
      %613 = vmatpush1.bf16.msra.mxu0 %v588
      %614 = vmatprep.subr.bf16.mxu0 0
      %615 = vmatpush1.bf16.msra.mxu0 %v587
      %616 = vmatprep.subr.bf16.mxu0 0
      %617 = vmatpush1.bf16.msra.mxu0 %v586
      %618 = vmatprep.subr.bf16.mxu0 0
      %619 = vmatpush2.bf16.msra.mxu0 0
      %620 = vmatprep.subr.bf16.mxu0 0
      %621 = vmatpush2.bf16.msra.mxu0 0
      %622 = vmatprep.subr.bf16.mxu0 0
      %623 = vmatpush2.bf16.msra.mxu0 0
      %624 = vmatprep.subr.bf16.mxu0 0
      %625 = vmatpush2.bf16.msra.mxu0 0
      %626 = vmatprep.subr.bf16.mxu0 0
      %627 = vmatpush2.bf16.msra.mxu0 0
      %628 = vmatprep.subr.bf16.mxu0 0
      %629 = vmatpush2.bf16.msra.mxu0 0
      %630 = vmatprep.subr.bf16.mxu0 0
      %631 = vmatpush2.bf16.msra.mxu0 0
      %632 = vmatprep.subr.bf16.mxu0 0
      %633 = vmatpush2.bf16.msra.mxu0 0
      %634 = vmatprep.mubr.bf16.mxu0 0
      %635 = vmatmul.mubr.bf16.gmra.mxu0 %v522
      %v636 = vpop.f32.mrf.mxu0
      %v637 = vadd.f32 0.0, %v636
      %v638 = vpop.f32.mrf.mxu0
      %v639 = vpop.f32.mrf.mxu0
      %v640 = vadd.f32 0.0, %v639
      %v641 = vpop.f32.mrf.mxu0
      %642 = vmatprep.mubr.bf16.mxu0 0
      %643 = vmatmul.mubr.bf16.gmra.mxu0 %v523
      %v644 = vpop.f32.mrf.mxu0
      %v645 = vadd.f32 0.0, %v644
      %v646 = vpop.f32.mrf.mxu0
      %v647 = vpop.f32.mrf.mxu0
      %v648 = vadd.f32 0.0, %v647
      %v649 = vpop.f32.mrf.mxu0
      %650 = vmatprep.mubr.bf16.mxu0 0
      %651 = vmatmul.mubr.bf16.gmra.mxu0 %v524
      %v652 = vpop.f32.mrf.mxu0
      %v653 = vadd.f32 0.0, %v652
      %v654 = vpop.f32.mrf.mxu0
      %v655 = vpop.f32.mrf.mxu0
      %v656 = vadd.f32 0.0, %v655
      %v657 = vpop.f32.mrf.mxu0
      %658 = vmatprep.mubr.bf16.mxu0 0
      %659 = vmatmul.mubr.bf16.gmra.mxu0 %v525
      %v660 = vpop.f32.mrf.mxu0
      %v661 = vadd.f32 0.0, %v660
      %v662 = vpop.f32.mrf.mxu0
      %v663 = vpop.f32.mrf.mxu0
      %v664 = vadd.f32 0.0, %v663
      %v665 = vpop.f32.mrf.mxu0
      %666 = vmatprep.mubr.bf16.mxu0 0
      %667 = vmatmul.mubr.bf16.gmra.mxu0 %v526
      %v668 = vpop.f32.mrf.mxu0
      %v669 = vadd.f32 0.0, %v668
      %v670 = vpop.f32.mrf.mxu0
      %v671 = vpop.f32.mrf.mxu0
      %v672 = vadd.f32 0.0, %v671
      %v673 = vpop.f32.mrf.mxu0
      %674 = vmatprep.mubr.bf16.mxu0 0
      %675 = vmatmul.mubr.bf16.gmra.mxu0 %v527
      %v676 = vpop.f32.mrf.mxu0
      %v677 = vadd.f32 0.0, %v676
      %v678 = vpop.f32.mrf.mxu0
      %v679 = vpop.f32.mrf.mxu0
      %v680 = vadd.f32 0.0, %v679
      %v681 = vpop.f32.mrf.mxu0
      %682 = vmatprep.mubr.bf16.mxu0 0
      %683 = vmatmul.mubr.bf16.gmra.mxu0 %v528
      %v684 = vpop.f32.mrf.mxu0
      %v685 = vadd.f32 0.0, %v684
      %v686 = vpop.f32.mrf.mxu0
      %v687 = vpop.f32.mrf.mxu0
      %v688 = vadd.f32 0.0, %v687
      %v689 = vpop.f32.mrf.mxu0
      %690 = vmatprep.mubr.bf16.mxu0 0
      %691 = vmatmul.mubr.bf16.gmra.mxu0 %v529
      %v692 = vpop.f32.mrf.mxu0
      %v693 = vadd.f32 0.0, %v692
      %v694 = vpop.f32.mrf.mxu0
      %v695 = vpop.f32.mrf.mxu0
      %v696 = vadd.f32 0.0, %v695
      %v697 = vpop.f32.mrf.mxu0
      %698 = vmatprep.mubr.bf16.mxu0 0
      %699 = vmatmul.mubr.bf16.gmra.mxu0 %v530
      %v700 = vpop.f32.mrf.mxu0
      %v701 = vadd.f32 0.0, %v700
      %v702 = vpop.f32.mrf.mxu0
      %v703 = vpop.f32.mrf.mxu0
      %v704 = vadd.f32 0.0, %v703
      %v705 = vpop.f32.mrf.mxu0
      %706 = vmatprep.mubr.bf16.mxu0 0
      %707 = vmatmul.mubr.bf16.gmra.mxu0 %v531
      %v708 = vpop.f32.mrf.mxu0
      %v709 = vadd.f32 0.0, %v708
      %v710 = vpop.f32.mrf.mxu0
      %v711 = vpop.f32.mrf.mxu0
      %v712 = vadd.f32 0.0, %v711
      %v713 = vpop.f32.mrf.mxu0
      %714 = vmatprep.mubr.bf16.mxu0 0
      %715 = vmatmul.mubr.bf16.gmra.mxu0 %v532
      %v716 = vpop.f32.mrf.mxu0
      %v717 = vadd.f32 0.0, %v716
      %v718 = vpop.f32.mrf.mxu0
      %v719 = vpop.f32.mrf.mxu0
      %v720 = vadd.f32 0.0, %v719
      %v721 = vpop.f32.mrf.mxu0
      %722 = vmatprep.mubr.bf16.mxu0 0
      %723 = vmatmul.mubr.bf16.gmra.mxu0 %v533
      %v724 = vpop.f32.mrf.mxu0
      %v725 = vadd.f32 0.0, %v724
      %v726 = vpop.f32.mrf.mxu0
      %v727 = vpop.f32.mrf.mxu0
      %v728 = vadd.f32 0.0, %v727
      %v729 = vpop.f32.mrf.mxu0
      %730 = vmatprep.mubr.bf16.mxu0 0
      %731 = vmatmul.mubr.bf16.gmra.mxu0 %v534
      %v732 = vpop.f32.mrf.mxu0
      %v733 = vadd.f32 0.0, %v732
      %v734 = vpop.f32.mrf.mxu0
      %v735 = vpop.f32.mrf.mxu0
      %v736 = vadd.f32 0.0, %v735
      %v737 = vpop.f32.mrf.mxu0
      %738 = vmatprep.mubr.bf16.mxu0 0
      %739 = vmatmul.mubr.bf16.gmra.mxu0 %v535
      %v740 = vpop.f32.mrf.mxu0
      %v741 = vadd.f32 0.0, %v740
      %v742 = vpop.f32.mrf.mxu0
      %v743 = vpop.f32.mrf.mxu0
      %v744 = vadd.f32 0.0, %v743
      %v745 = vpop.f32.mrf.mxu0
      %746 = vmatprep.mubr.bf16.mxu0 0
      %747 = vmatmul.mubr.bf16.gmra.mxu0 %v536
      %v748 = vpop.f32.mrf.mxu0
      %v749 = vadd.f32 0.0, %v748
      %v750 = vpop.f32.mrf.mxu0
      %v751 = vpop.f32.mrf.mxu0
      %v752 = vadd.f32 0.0, %v751
      %v753 = vpop.f32.mrf.mxu0
      %754 = vmatprep.mubr.bf16.mxu0 0
      %755 = vmatmul.mubr.bf16.gmra.mxu0 %v537
      %v756 = vpop.f32.mrf.mxu0
      %v757 = vadd.f32 0.0, %v756
      %v758 = vpop.f32.mrf.mxu0
      %v759 = vpop.f32.mrf.mxu0
      %v760 = vadd.f32 0.0, %v759
      %v761 = vpop.f32.mrf.mxu0
      %762 = vdwg.mxu0
      %v763 = vadd.f32 %v378, %v637
      %v764 = vadd.f32 %v379, %v640
      %v765 = vadd.f32 %v380, %v645
      %v766 = vadd.f32 %v381, %v648
      %v767 = vadd.f32 %v382, %v653
      %v768 = vadd.f32 %v383, %v656
      %v769 = vadd.f32 %v384, %v661
      %v770 = vadd.f32 %v385, %v664
      %v771 = vadd.f32 %v386, %v669
      %v772 = vadd.f32 %v387, %v672
      %v773 = vadd.f32 %v388, %v677
      %v774 = vadd.f32 %v389, %v680
      %v775 = vadd.f32 %v390, %v685
      %v776 = vadd.f32 %v391, %v688
      %v777 = vadd.f32 %v392, %v693
      %v778 = vadd.f32 %v393, %v696
      %v779 = vadd.f32 %v394, %v701
      %v780 = vadd.f32 %v395, %v704
      %v781 = vadd.f32 %v396, %v709
      %v782 = vadd.f32 %v397, %v712
      %v783 = vadd.f32 %v398, %v717
      %v784 = vadd.f32 %v399, %v720
      %v785 = vadd.f32 %v400, %v725
      %v786 = vadd.f32 %v401, %v728
      %v787 = vadd.f32 %v402, %v733
      %v788 = vadd.f32 %v403, %v736
      %v789 = vadd.f32 %v404, %v741
      %v790 = vadd.f32 %v405, %v744
      %v791 = vadd.f32 %v406, %v749
      %v792 = vadd.f32 %v407, %v752
      %v793 = vadd.f32 %v408, %v757
      %v794 = vadd.f32 %v409, %v760
      %795 = vst [vmem:[#allocation2] sm:$0xff] %v763
      %796 = vst [vmem:[#allocation2 + $0x8] sm:$0xff] %v764
      %797 = vst [vmem:[#allocation2 + $0x10] sm:$0xff] %v765
      %798 = vst [vmem:[#allocation2 + $0x18] sm:$0xff] %v766
      %799 = vst [vmem:[#allocation2 + $0x20] sm:$0xff] %v767
      %800 = vst [vmem:[#allocation2 + $0x28] sm:$0xff] %v768
      %801 = vst [vmem:[#allocation2 + $0x30] sm:$0xff] %v769
      %802 = vst [vmem:[#allocation2 + $0x38] sm:$0xff] %v770
      %803 = vst [vmem:[#allocation2 + $0x40] sm:$0xff] %v771
      %804 = vst [vmem:[#allocation2 + $0x48] sm:$0xff] %v772
      %805 = vst [vmem:[#allocation2 + $0x50] sm:$0xff] %v773
      %806 = vst [vmem:[#allocation2 + $0x58] sm:$0xff] %v774
      %807 = vst [vmem:[#allocation2 + $0x60] sm:$0xff] %v775
      %808 = vst [vmem:[#allocation2 + $0x68] sm:$0xff] %v776
      %809 = vst [vmem:[#allocation2 + $0x70] sm:$0xff] %v777
      %810 = vst [vmem:[#allocation2 + $0x78] sm:$0xff] %v778
      %811 = vst [vmem:[#allocation2 + $0x80] sm:$0xff] %v779
      %812 = vst [vmem:[#allocation2 + $0x88] sm:$0xff] %v780
      %813 = vst [vmem:[#allocation2 + $0x90] sm:$0xff] %v781
      %814 = vst [vmem:[#allocation2 + $0x98] sm:$0xff] %v782
      %815 = vst [vmem:[#allocation2 + $0xa0] sm:$0xff] %v783
      %816 = vst [vmem:[#allocation2 + $0xa8] sm:$0xff] %v784
      %817 = vst [vmem:[#allocation2 + $0xb0] sm:$0xff] %v785
      %818 = vst [vmem:[#allocation2 + $0xb8] sm:$0xff] %v786
      %819 = vst [vmem:[#allocation2 + $0xc0] sm:$0xff] %v787
      %820 = vst [vmem:[#allocation2 + $0xc8] sm:$0xff] %v788
      %821 = vst [vmem:[#allocation2 + $0xd0] sm:$0xff] %v789
      %822 = vst [vmem:[#allocation2 + $0xd8] sm:$0xff] %v790
      %823 = vst [vmem:[#allocation2 + $0xe0] sm:$0xff] %v791
      %824 = vst [vmem:[#allocation2 + $0xe8] sm:$0xff] %v792
      %825 = vst [vmem:[#allocation2 + $0xf0] sm:$0xff] %v793
      %826 = vst [vmem:[#allocation2 + $0xf8] sm:$0xff] %v794
      // Predicated region
      $region45: #{run.1} parent=39 // pred_check
        %p827 = pneg %p342
      $region46: #{run.1} parent=39 // pred_check_branch
        %829 = sbr.rel (%p827) target = $region48
      $region47: #{run.1} parent=39 // pred_region
        %v830 = vld [vmem:[#allocation2] sm:$0xff]
        %v831 = vld [vmem:[#allocation2 + $0x8] sm:$0xff]
        %v832 = vld [vmem:[#allocation2 + $0x10] sm:$0xff]
        %v833 = vld [vmem:[#allocation2 + $0x18] sm:$0xff]
        %v834 = vld [vmem:[#allocation2 + $0x20] sm:$0xff]
        %v835 = vld [vmem:[#allocation2 + $0x28] sm:$0xff]
        %v836 = vld [vmem:[#allocation2 + $0x30] sm:$0xff]
        %v837 = vld [vmem:[#allocation2 + $0x38] sm:$0xff]
        %v838 = vld [vmem:[#allocation2 + $0x40] sm:$0xff]
        %v839 = vld [vmem:[#allocation2 + $0x48] sm:$0xff]
        %v840 = vld [vmem:[#allocation2 + $0x50] sm:$0xff]
        %v841 = vld [vmem:[#allocation2 + $0x58] sm:$0xff]
        %v842 = vld [vmem:[#allocation2 + $0x60] sm:$0xff]
        %v843 = vld [vmem:[#allocation2 + $0x68] sm:$0xff]
        %v844 = vld [vmem:[#allocation2 + $0x70] sm:$0xff]
        %v845 = vld [vmem:[#allocation2 + $0x78] sm:$0xff]
        %v846 = vld [vmem:[#allocation2 + $0x80] sm:$0xff]
        %v847 = vld [vmem:[#allocation2 + $0x88] sm:$0xff]
        %v848 = vld [vmem:[#allocation2 + $0x90] sm:$0xff]
        %v849 = vld [vmem:[#allocation2 + $0x98] sm:$0xff]
        %v850 = vld [vmem:[#allocation2 + $0xa0] sm:$0xff]
        %v851 = vld [vmem:[#allocation2 + $0xa8] sm:$0xff]
        %v852 = vld [vmem:[#allocation2 + $0xb0] sm:$0xff]
        %v853 = vld [vmem:[#allocation2 + $0xb8] sm:$0xff]
        %v854 = vld [vmem:[#allocation2 + $0xc0] sm:$0xff]
        %v855 = vld [vmem:[#allocation2 + $0xc8] sm:$0xff]
        %v856 = vld [vmem:[#allocation2 + $0xd0] sm:$0xff]
        %v857 = vld [vmem:[#allocation2 + $0xd8] sm:$0xff]
        %v858 = vld [vmem:[#allocation2 + $0xe0] sm:$0xff]
        %v859 = vld [vmem:[#allocation2 + $0xe8] sm:$0xff]
        %v860 = vld [vmem:[#allocation2 + $0xf0] sm:$0xff]
        %v861 = vld [vmem:[#allocation2 + $0xf8] sm:$0xff]
        %v862 = vld [vmem:[%s325] sm:$0x1]
        %v864 = vlaneseq
        %v865 = vshrl.u32 %v864, 7
        %v866 = vsub.s32 0, %v865
        %v867 = vrot.slane %v862, %v866
        %v869 = vadd.f32 %v830, %v867
        %v870 = vadd.f32 %v831, %v867
        %v871 = vadd.f32 %v832, %v867
        %v872 = vadd.f32 %v833, %v867
        %v873 = vadd.f32 %v834, %v867
        %v874 = vadd.f32 %v835, %v867
        %v875 = vadd.f32 %v836, %v867
        %v876 = vadd.f32 %v837, %v867
        %v877 = vadd.f32 %v838, %v867
        %v878 = vadd.f32 %v839, %v867
        %v879 = vadd.f32 %v840, %v867
        %v880 = vadd.f32 %v841, %v867
        %v881 = vadd.f32 %v842, %v867
        %v882 = vadd.f32 %v843, %v867
        %v883 = vadd.f32 %v844, %v867
        %v884 = vadd.f32 %v845, %v867
        %v885 = vadd.f32 %v846, %v867
        %v886 = vadd.f32 %v847, %v867
        %v887 = vadd.f32 %v848, %v867
        %v888 = vadd.f32 %v849, %v867
        %v889 = vadd.f32 %v850, %v867
        %v890 = vadd.f32 %v851, %v867
        %v891 = vadd.f32 %v852, %v867
        %v892 = vadd.f32 %v853, %v867
        %v893 = vadd.f32 %v854, %v867
        %v894 = vadd.f32 %v855, %v867
        %v895 = vadd.f32 %v856, %v867
        %v896 = vadd.f32 %v857, %v867
        %v897 = vadd.f32 %v858, %v867
        %v898 = vadd.f32 %v859, %v867
        %v899 = vadd.f32 %v860, %v867
        %v900 = vadd.f32 %v861, %v867
        %v901 = vlaneseq
        %v902 = vand.u32 %v901, 127
        %vm903 = vcmp.lt.s32.totalorder %v902, 96
        %v904 = vsel %vm903, %v869, 0.0
        %v905 = vsel %vm903, %v870, 0.0
        %v906 = vsel %vm903, %v871, 0.0
        %v907 = vsel %vm903, %v872, 0.0
        %v908 = vsel %vm903, %v873, 0.0
        %v909 = vsel %vm903, %v874, 0.0
        %v910 = vsel %vm903, %v875, 0.0
        %v911 = vsel %vm903, %v876, 0.0
        %v912 = vsel %vm903, %v877, 0.0
        %v913 = vsel %vm903, %v878, 0.0
        %v914 = vsel %vm903, %v879, 0.0
        %v915 = vsel %vm903, %v880, 0.0
        %v916 = vsel %vm903, %v881, 0.0
        %v917 = vsel %vm903, %v882, 0.0
        %v918 = vsel %vm903, %v883, 0.0
        %v919 = vsel %vm903, %v884, 0.0
        %v920 = vsel %vm903, %v885, 0.0
        %v921 = vsel %vm903, %v886, 0.0
        %v922 = vsel %vm903, %v887, 0.0
        %v923 = vsel %vm903, %v888, 0.0
        %v924 = vsel %vm903, %v889, 0.0
        %v925 = vsel %vm903, %v890, 0.0
        %v926 = vsel %vm903, %v891, 0.0
        %v927 = vsel %vm903, %v892, 0.0
        %v928 = vsel %vm903, %v893, 0.0
        %v929 = vsel %vm903, %v894, 0.0
        %v930 = vsel %vm903, %v895, 0.0
        %v931 = vsel %vm903, %v896, 0.0
        %v932 = vsel %vm903, %v897, 0.0
        %v933 = vsel %vm903, %v898, 0.0
        %v934 = vsel %vm903, %v899, 0.0
        %v935 = vsel %vm903, %v900, 0.0
        %936 = vadd.xlane.f32.xlu0 %v904
        %v937 = vpop.xlane.xlu0 %936
        %938 = vadd.xlane.f32.xlu0 %v905
        %v939 = vpop.xlane.xlu0 %938
        %940 = vadd.xlane.f32.xlu0 %v906
        %v941 = vpop.xlane.xlu0 %940
        %942 = vadd.xlane.f32.xlu0 %v907
        %v943 = vpop.xlane.xlu0 %942
        %944 = vadd.xlane.f32.xlu0 %v908
        %v945 = vpop.xlane.xlu0 %944
        %946 = vadd.xlane.f32.xlu0 %v909
        %v947 = vpop.xlane.xlu0 %946
        %948 = vadd.xlane.f32.xlu0 %v910
        %v949 = vpop.xlane.xlu0 %948
        %950 = vadd.xlane.f32.xlu0 %v911
        %v951 = vpop.xlane.xlu0 %950
        %952 = vadd.xlane.f32.xlu0 %v912
        %v953 = vpop.xlane.xlu0 %952
        %954 = vadd.xlane.f32.xlu0 %v913
        %v955 = vpop.xlane.xlu0 %954
        %956 = vadd.xlane.f32.xlu0 %v914
        %v957 = vpop.xlane.xlu0 %956
        %958 = vadd.xlane.f32.xlu0 %v915
        %v959 = vpop.xlane.xlu0 %958
        %960 = vadd.xlane.f32.xlu0 %v916
        %v961 = vpop.xlane.xlu0 %960
        %962 = vadd.xlane.f32.xlu0 %v917
        %v963 = vpop.xlane.xlu0 %962
        %964 = vadd.xlane.f32.xlu0 %v918
        %v965 = vpop.xlane.xlu0 %964
        %966 = vadd.xlane.f32.xlu0 %v919
        %v967 = vpop.xlane.xlu0 %966
        %968 = vadd.xlane.f32.xlu0 %v920
        %v969 = vpop.xlane.xlu0 %968
        %970 = vadd.xlane.f32.xlu0 %v921
        %v971 = vpop.xlane.xlu0 %970
        %972 = vadd.xlane.f32.xlu0 %v922
        %v973 = vpop.xlane.xlu0 %972
        %974 = vadd.xlane.f32.xlu0 %v923
        %v975 = vpop.xlane.xlu0 %974
        %976 = vadd.xlane.f32.xlu0 %v924
        %v977 = vpop.xlane.xlu0 %976
        %978 = vadd.xlane.f32.xlu0 %v925
        %v979 = vpop.xlane.xlu0 %978
        %980 = vadd.xlane.f32.xlu0 %v926
        %v981 = vpop.xlane.xlu0 %980
        %982 = vadd.xlane.f32.xlu0 %v927
        %v983 = vpop.xlane.xlu0 %982
        %984 = vadd.xlane.f32.xlu0 %v928
        %v985 = vpop.xlane.xlu0 %984
        %986 = vadd.xlane.f32.xlu0 %v929
        %v987 = vpop.xlane.xlu0 %986
        %988 = vadd.xlane.f32.xlu0 %v930
        %v989 = vpop.xlane.xlu0 %988
        %990 = vadd.xlane.f32.xlu0 %v931
        %v991 = vpop.xlane.xlu0 %990
        %992 = vadd.xlane.f32.xlu0 %v932
        %v993 = vpop.xlane.xlu0 %992
        %994 = vadd.xlane.f32.xlu0 %v933
        %v995 = vpop.xlane.xlu0 %994
        %996 = vadd.xlane.f32.xlu0 %v934
        %v997 = vpop.xlane.xlu0 %996
        %998 = vadd.xlane.f32.xlu0 %v935
        %v999 = vpop.xlane.xlu0 %998
        %v1000 = vmul.f32 %v937, 0.010416667
        %v1001 = vmul.f32 %v939, 0.010416667
        %v1002 = vmul.f32 %v941, 0.010416667
        %v1003 = vmul.f32 %v943, 0.010416667
        %v1004 = vmul.f32 %v945, 0.010416667
        %v1005 = vmul.f32 %v947, 0.010416667
        %v1006 = vmul.f32 %v949, 0.010416667
        %v1007 = vmul.f32 %v951, 0.010416667
        %v1008 = vmul.f32 %v953, 0.010416667
        %v1009 = vmul.f32 %v955, 0.010416667
        %v1010 = vmul.f32 %v957, 0.010416667
        %v1011 = vmul.f32 %v959, 0.010416667
        %v1012 = vmul.f32 %v961, 0.010416667
        %v1013 = vmul.f32 %v963, 0.010416667
        %v1014 = vmul.f32 %v965, 0.010416667
        %v1015 = vmul.f32 %v967, 0.010416667
        %v1016 = vmul.f32 %v969, 0.010416667
        %v1017 = vmul.f32 %v971, 0.010416667
        %v1018 = vmul.f32 %v973, 0.010416667
        %v1019 = vmul.f32 %v975, 0.010416667
        %v1020 = vmul.f32 %v977, 0.010416667
        %v1021 = vmul.f32 %v979, 0.010416667
        %v1022 = vmul.f32 %v981, 0.010416667
        %v1023 = vmul.f32 %v983, 0.010416667
        %v1024 = vmul.f32 %v985, 0.010416667
        %v1025 = vmul.f32 %v987, 0.010416667
        %v1026 = vmul.f32 %v989, 0.010416667
        %v1027 = vmul.f32 %v991, 0.010416667
        %v1028 = vmul.f32 %v993, 0.010416667
        %v1029 = vmul.f32 %v995, 0.010416667
        %v1030 = vmul.f32 %v997, 0.010416667
        %v1031 = vmul.f32 %v999, 0.010416667
        %v1032 = vsub.f32 %v869, %v1000
        %v1033 = vsub.f32 %v870, %v1001
        %v1034 = vsub.f32 %v871, %v1002
        %v1035 = vsub.f32 %v872, %v1003
        %v1036 = vsub.f32 %v873, %v1004
        %v1037 = vsub.f32 %v874, %v1005
        %v1038 = vsub.f32 %v875, %v1006
        %v1039 = vsub.f32 %v876, %v1007
        %v1040 = vsub.f32 %v877, %v1008
        %v1041 = vsub.f32 %v878, %v1009
        %v1042 = vsub.f32 %v879, %v1010
        %v1043 = vsub.f32 %v880, %v1011
        %v1044 = vsub.f32 %v881, %v1012
        %v1045 = vsub.f32 %v882, %v1013
        %v1046 = vsub.f32 %v883, %v1014
        %v1047 = vsub.f32 %v884, %v1015
        %v1048 = vsub.f32 %v885, %v1016
        %v1049 = vsub.f32 %v886, %v1017
        %v1050 = vsub.f32 %v887, %v1018
        %v1051 = vsub.f32 %v888, %v1019
        %v1052 = vsub.f32 %v889, %v1020
        %v1053 = vsub.f32 %v890, %v1021
        %v1054 = vsub.f32 %v891, %v1022
        %v1055 = vsub.f32 %v892, %v1023
        %v1056 = vsub.f32 %v893, %v1024
        %v1057 = vsub.f32 %v894, %v1025
        %v1058 = vsub.f32 %v895, %v1026
        %v1059 = vsub.f32 %v896, %v1027
        %v1060 = vsub.f32 %v897, %v1028
        %v1061 = vsub.f32 %v898, %v1029
        %v1062 = vsub.f32 %v899, %v1030
        %v1063 = vsub.f32 %v900, %v1031
        %v1064 = vsel %vm903, %v1032, 0.0
        %v1065 = vsel %vm903, %v1033, 0.0
        %v1066 = vsel %vm903, %v1034, 0.0
        %v1067 = vsel %vm903, %v1035, 0.0
        %v1068 = vsel %vm903, %v1036, 0.0
        %v1069 = vsel %vm903, %v1037, 0.0
        %v1070 = vsel %vm903, %v1038, 0.0
        %v1071 = vsel %vm903, %v1039, 0.0
        %v1072 = vsel %vm903, %v1040, 0.0
        %v1073 = vsel %vm903, %v1041, 0.0
        %v1074 = vsel %vm903, %v1042, 0.0
        %v1075 = vsel %vm903, %v1043, 0.0
        %v1076 = vsel %vm903, %v1044, 0.0
        %v1077 = vsel %vm903, %v1045, 0.0
        %v1078 = vsel %vm903, %v1046, 0.0
        %v1079 = vsel %vm903, %v1047, 0.0
        %v1080 = vsel %vm903, %v1048, 0.0
        %v1081 = vsel %vm903, %v1049, 0.0
        %v1082 = vsel %vm903, %v1050, 0.0
        %v1083 = vsel %vm903, %v1051, 0.0
        %v1084 = vsel %vm903, %v1052, 0.0
        %v1085 = vsel %vm903, %v1053, 0.0
        %v1086 = vsel %vm903, %v1054, 0.0
        %v1087 = vsel %vm903, %v1055, 0.0
        %v1088 = vsel %vm903, %v1056, 0.0
        %v1089 = vsel %vm903, %v1057, 0.0
        %v1090 = vsel %vm903, %v1058, 0.0
        %v1091 = vsel %vm903, %v1059, 0.0
        %v1092 = vsel %vm903, %v1060, 0.0
        %v1093 = vsel %vm903, %v1061, 0.0
        %v1094 = vsel %vm903, %v1062, 0.0
        %v1095 = vsel %vm903, %v1063, 0.0
        %v1096 = vmul.f32 %v1064, %v1064
        %v1097 = vmul.f32 %v1065, %v1065
        %v1098 = vmul.f32 %v1066, %v1066
        %v1099 = vmul.f32 %v1067, %v1067
        %v1100 = vmul.f32 %v1068, %v1068
        %v1101 = vmul.f32 %v1069, %v1069
        %v1102 = vmul.f32 %v1070, %v1070
        %v1103 = vmul.f32 %v1071, %v1071
        %v1104 = vmul.f32 %v1072, %v1072
        %v1105 = vmul.f32 %v1073, %v1073
        %v1106 = vmul.f32 %v1074, %v1074
        %v1107 = vmul.f32 %v1075, %v1075
        %v1108 = vmul.f32 %v1076, %v1076
        %v1109 = vmul.f32 %v1077, %v1077
        %v1110 = vmul.f32 %v1078, %v1078
        %v1111 = vmul.f32 %v1079, %v1079
        %v1112 = vmul.f32 %v1080, %v1080
        %v1113 = vmul.f32 %v1081, %v1081
        %v1114 = vmul.f32 %v1082, %v1082
        %v1115 = vmul.f32 %v1083, %v1083
        %v1116 = vmul.f32 %v1084, %v1084
        %v1117 = vmul.f32 %v1085, %v1085
        %v1118 = vmul.f32 %v1086, %v1086
        %v1119 = vmul.f32 %v1087, %v1087
        %v1120 = vmul.f32 %v1088, %v1088
        %v1121 = vmul.f32 %v1089, %v1089
        %v1122 = vmul.f32 %v1090, %v1090
        %v1123 = vmul.f32 %v1091, %v1091
        %v1124 = vmul.f32 %v1092, %v1092
        %v1125 = vmul.f32 %v1093, %v1093
        %v1126 = vmul.f32 %v1094, %v1094
        %v1127 = vmul.f32 %v1095, %v1095
        %1128 = vadd.xlane.f32.xlu0 %v1096
        %v1129 = vpop.xlane.xlu0 %1128
        %1130 = vadd.xlane.f32.xlu0 %v1097
        %v1131 = vpop.xlane.xlu0 %1130
        %1132 = vadd.xlane.f32.xlu0 %v1098
        %v1133 = vpop.xlane.xlu0 %1132
        %1134 = vadd.xlane.f32.xlu0 %v1099
        %v1135 = vpop.xlane.xlu0 %1134
        %1136 = vadd.xlane.f32.xlu0 %v1100
        %v1137 = vpop.xlane.xlu0 %1136
        %1138 = vadd.xlane.f32.xlu0 %v1101
        %v1139 = vpop.xlane.xlu0 %1138
        %1140 = vadd.xlane.f32.xlu0 %v1102
        %v1141 = vpop.xlane.xlu0 %1140
        %1142 = vadd.xlane.f32.xlu0 %v1103
        %v1143 = vpop.xlane.xlu0 %1142
        %1144 = vadd.xlane.f32.xlu0 %v1104
        %v1145 = vpop.xlane.xlu0 %1144
        %1146 = vadd.xlane.f32.xlu0 %v1105
        %v1147 = vpop.xlane.xlu0 %1146
        %1148 = vadd.xlane.f32.xlu0 %v1106
        %v1149 = vpop.xlane.xlu0 %1148
        %1150 = vadd.xlane.f32.xlu0 %v1107
        %v1151 = vpop.xlane.xlu0 %1150
        %1152 = vadd.xlane.f32.xlu0 %v1108
        %v1153 = vpop.xlane.xlu0 %1152
        %1154 = vadd.xlane.f32.xlu0 %v1109
        %v1155 = vpop.xlane.xlu0 %1154
        %1156 = vadd.xlane.f32.xlu0 %v1110
        %v1157 = vpop.xlane.xlu0 %1156
        %1158 = vadd.xlane.f32.xlu0 %v1111
        %v1159 = vpop.xlane.xlu0 %1158
        %1160 = vadd.xlane.f32.xlu0 %v1112
        %v1161 = vpop.xlane.xlu0 %1160
        %1162 = vadd.xlane.f32.xlu0 %v1113
        %v1163 = vpop.xlane.xlu0 %1162
        %1164 = vadd.xlane.f32.xlu0 %v1114
        %v1165 = vpop.xlane.xlu0 %1164
        %1166 = vadd.xlane.f32.xlu0 %v1115
        %v1167 = vpop.xlane.xlu0 %1166
        %1168 = vadd.xlane.f32.xlu0 %v1116
        %v1169 = vpop.xlane.xlu0 %1168
        %1170 = vadd.xlane.f32.xlu0 %v1117
        %v1171 = vpop.xlane.xlu0 %1170
        %1172 = vadd.xlane.f32.xlu0 %v1118
        %v1173 = vpop.xlane.xlu0 %1172
        %1174 = vadd.xlane.f32.xlu0 %v1119
        %v1175 = vpop.xlane.xlu0 %1174
        %1176 = vadd.xlane.f32.xlu0 %v1120
        %v1177 = vpop.xlane.xlu0 %1176
        %1178 = vadd.xlane.f32.xlu0 %v1121
        %v1179 = vpop.xlane.xlu0 %1178
        %1180 = vadd.xlane.f32.xlu0 %v1122
        %v1181 = vpop.xlane.xlu0 %1180
        %1182 = vadd.xlane.f32.xlu0 %v1123
        %v1183 = vpop.xlane.xlu0 %1182
        %1184 = vadd.xlane.f32.xlu0 %v1124
        %v1185 = vpop.xlane.xlu0 %1184
        %1186 = vadd.xlane.f32.xlu0 %v1125
        %v1187 = vpop.xlane.xlu0 %1186
        %1188 = vadd.xlane.f32.xlu0 %v1126
        %v1189 = vpop.xlane.xlu0 %1188
        %1190 = vadd.xlane.f32.xlu0 %v1127
        %v1191 = vpop.xlane.xlu0 %1190
        %v1192 = vmul.f32 %v1129, 0.010416667
        %v1193 = vmul.f32 %v1131, 0.010416667
        %v1194 = vmul.f32 %v1133, 0.010416667
        %v1195 = vmul.f32 %v1135, 0.010416667
        %v1196 = vmul.f32 %v1137, 0.010416667
        %v1197 = vmul.f32 %v1139, 0.010416667
        %v1198 = vmul.f32 %v1141, 0.010416667
        %v1199 = vmul.f32 %v1143, 0.010416667
        %v1200 = vmul.f32 %v1145, 0.010416667
        %v1201 = vmul.f32 %v1147, 0.010416667
        %v1202 = vmul.f32 %v1149, 0.010416667
        %v1203 = vmul.f32 %v1151, 0.010416667
        %v1204 = vmul.f32 %v1153, 0.010416667
        %v1205 = vmul.f32 %v1155, 0.010416667
        %v1206 = vmul.f32 %v1157, 0.010416667
        %v1207 = vmul.f32 %v1159, 0.010416667
        %v1208 = vmul.f32 %v1161, 0.010416667
        %v1209 = vmul.f32 %v1163, 0.010416667
        %v1210 = vmul.f32 %v1165, 0.010416667
        %v1211 = vmul.f32 %v1167, 0.010416667
        %v1212 = vmul.f32 %v1169, 0.010416667
        %v1213 = vmul.f32 %v1171, 0.010416667
        %v1214 = vmul.f32 %v1173, 0.010416667
        %v1215 = vmul.f32 %v1175, 0.010416667
        %v1216 = vmul.f32 %v1177, 0.010416667
        %v1217 = vmul.f32 %v1179, 0.010416667
        %v1218 = vmul.f32 %v1181, 0.010416667
        %v1219 = vmul.f32 %v1183, 0.010416667
        %v1220 = vmul.f32 %v1185, 0.010416667
        %v1221 = vmul.f32 %v1187, 0.010416667
        %v1222 = vmul.f32 %v1189, 0.010416667
        %v1223 = vmul.f32 %v1191, 0.010416667
        %v1224 = vadd.f32 %v1192, 1e-05
        %v1225 = vadd.f32 %v1193, 1e-05
        %v1226 = vadd.f32 %v1194, 1e-05
        %v1227 = vadd.f32 %v1195, 1e-05
        %v1228 = vadd.f32 %v1196, 1e-05
        %v1229 = vadd.f32 %v1197, 1e-05
        %v1230 = vadd.f32 %v1198, 1e-05
        %v1231 = vadd.f32 %v1199, 1e-05
        %v1232 = vadd.f32 %v1200, 1e-05
        %v1233 = vadd.f32 %v1201, 1e-05
        %v1234 = vadd.f32 %v1202, 1e-05
        %v1235 = vadd.f32 %v1203, 1e-05
        %v1236 = vadd.f32 %v1204, 1e-05
        %v1237 = vadd.f32 %v1205, 1e-05
        %v1238 = vadd.f32 %v1206, 1e-05
        %v1239 = vadd.f32 %v1207, 1e-05
        %v1240 = vadd.f32 %v1208, 1e-05
        %v1241 = vadd.f32 %v1209, 1e-05
        %v1242 = vadd.f32 %v1210, 1e-05
        %v1243 = vadd.f32 %v1211, 1e-05
        %v1244 = vadd.f32 %v1212, 1e-05
        %v1245 = vadd.f32 %v1213, 1e-05
        %v1246 = vadd.f32 %v1214, 1e-05
        %v1247 = vadd.f32 %v1215, 1e-05
        %v1248 = vadd.f32 %v1216, 1e-05
        %v1249 = vadd.f32 %v1217, 1e-05
        %v1250 = vadd.f32 %v1218, 1e-05
        %v1251 = vadd.f32 %v1219, 1e-05
        %v1252 = vadd.f32 %v1220, 1e-05
        %v1253 = vadd.f32 %v1221, 1e-05
        %v1254 = vadd.f32 %v1222, 1e-05
        %v1255 = vadd.f32 %v1223, 1e-05
        %v1256 = vrsqrt.pop %v1224
        %v1257 = vrsqrt.pop %v1225
        %v1258 = vrsqrt.pop %v1226
        %v1259 = vrsqrt.pop %v1227
        %v1260 = vrsqrt.pop %v1228
        %v1261 = vrsqrt.pop %v1229
        %v1262 = vrsqrt.pop %v1230
        %v1263 = vrsqrt.pop %v1231
        %v1264 = vrsqrt.pop %v1232
        %v1265 = vrsqrt.pop %v1233
        %v1266 = vrsqrt.pop %v1234
        %v1267 = vrsqrt.pop %v1235
        %v1268 = vrsqrt.pop %v1236
        %v1269 = vrsqrt.pop %v1237
        %v1270 = vrsqrt.pop %v1238
        %v1271 = vrsqrt.pop %v1239
        %v1272 = vrsqrt.pop %v1240
        %v1273 = vrsqrt.pop %v1241
        %v1274 = vrsqrt.pop %v1242
        %v1275 = vrsqrt.pop %v1243
        %v1276 = vrsqrt.pop %v1244
        %v1277 = vrsqrt.pop %v1245
        %v1278 = vrsqrt.pop %v1246
        %v1279 = vrsqrt.pop %v1247
        %v1280 = vrsqrt.pop %v1248
        %v1281 = vrsqrt.pop %v1249
        %v1282 = vrsqrt.pop %v1250
        %v1283 = vrsqrt.pop %v1251
        %v1284 = vrsqrt.pop %v1252
        %v1285 = vrsqrt.pop %v1253
        %v1286 = vrsqrt.pop %v1254
        %v1287 = vrsqrt.pop %v1255
        %v1288 = vmul.f32 %v1064, %v1256
        %v1289 = vmul.f32 %v1065, %v1257
        %v1290 = vmul.f32 %v1066, %v1258
        %v1291 = vmul.f32 %v1067, %v1259
        %v1292 = vmul.f32 %v1068, %v1260
        %v1293 = vmul.f32 %v1069, %v1261
        %v1294 = vmul.f32 %v1070, %v1262
        %v1295 = vmul.f32 %v1071, %v1263
        %v1296 = vmul.f32 %v1072, %v1264
        %v1297 = vmul.f32 %v1073, %v1265
        %v1298 = vmul.f32 %v1074, %v1266
        %v1299 = vmul.f32 %v1075, %v1267
        %v1300 = vmul.f32 %v1076, %v1268
        %v1301 = vmul.f32 %v1077, %v1269
        %v1302 = vmul.f32 %v1078, %v1270
        %v1303 = vmul.f32 %v1079, %v1271
        %v1304 = vmul.f32 %v1080, %v1272
        %v1305 = vmul.f32 %v1081, %v1273
        %v1306 = vmul.f32 %v1082, %v1274
        %v1307 = vmul.f32 %v1083, %v1275
        %v1308 = vmul.f32 %v1084, %v1276
        %v1309 = vmul.f32 %v1085, %v1277
        %v1310 = vmul.f32 %v1086, %v1278
        %v1311 = vmul.f32 %v1087, %v1279
        %v1312 = vmul.f32 %v1088, %v1280
        %v1313 = vmul.f32 %v1089, %v1281
        %v1314 = vmul.f32 %v1090, %v1282
        %v1315 = vmul.f32 %v1091, %v1283
        %v1316 = vmul.f32 %v1092, %v1284
        %v1317 = vmul.f32 %v1093, %v1285
        %v1318 = vmul.f32 %v1094, %v1286
        %v1319 = vmul.f32 %v1095, %v1287
        %v1320 = vld [vmem:[%s328] sm:$0x1]
        %v1322 = vlaneseq
        %v1323 = vshrl.u32 %v1322, 7
        %v1324 = vsub.s32 0, %v1323
        %v1325 = vrot.slane %v1320, %v1324
        %v1327 = vmul.f32 %v1288, %v1325
        %v1328 = vmul.f32 %v1289, %v1325
        %v1329 = vmul.f32 %v1290, %v1325
        %v1330 = vmul.f32 %v1291, %v1325
        %v1331 = vmul.f32 %v1292, %v1325
        %v1332 = vmul.f32 %v1293, %v1325
        %v1333 = vmul.f32 %v1294, %v1325
        %v1334 = vmul.f32 %v1295, %v1325
        %v1335 = vmul.f32 %v1296, %v1325
        %v1336 = vmul.f32 %v1297, %v1325
        %v1337 = vmul.f32 %v1298, %v1325
        %v1338 = vmul.f32 %v1299, %v1325
        %v1339 = vmul.f32 %v1300, %v1325
        %v1340 = vmul.f32 %v1301, %v1325
        %v1341 = vmul.f32 %v1302, %v1325
        %v1342 = vmul.f32 %v1303, %v1325
        %v1343 = vmul.f32 %v1304, %v1325
        %v1344 = vmul.f32 %v1305, %v1325
        %v1345 = vmul.f32 %v1306, %v1325
        %v1346 = vmul.f32 %v1307, %v1325
        %v1347 = vmul.f32 %v1308, %v1325
        %v1348 = vmul.f32 %v1309, %v1325
        %v1349 = vmul.f32 %v1310, %v1325
        %v1350 = vmul.f32 %v1311, %v1325
        %v1351 = vmul.f32 %v1312, %v1325
        %v1352 = vmul.f32 %v1313, %v1325
        %v1353 = vmul.f32 %v1314, %v1325
        %v1354 = vmul.f32 %v1315, %v1325
        %v1355 = vmul.f32 %v1316, %v1325
        %v1356 = vmul.f32 %v1317, %v1325
        %v1357 = vmul.f32 %v1318, %v1325
        %v1358 = vmul.f32 %v1319, %v1325
        %v1359 = vld [vmem:[%s331] sm:$0x1]
        %v1361 = vlaneseq
        %v1362 = vshrl.u32 %v1361, 7
        %v1363 = vsub.s32 0, %v1362
        %v1364 = vrot.slane %v1359, %v1363
        %v1366 = vadd.f32 %v1327, %v1364
        %v1367 = vadd.f32 %v1328, %v1364
        %v1368 = vadd.f32 %v1329, %v1364
        %v1369 = vadd.f32 %v1330, %v1364
        %v1370 = vadd.f32 %v1331, %v1364
        %v1371 = vadd.f32 %v1332, %v1364
        %v1372 = vadd.f32 %v1333, %v1364
        %v1373 = vadd.f32 %v1334, %v1364
        %v1374 = vadd.f32 %v1335, %v1364
        %v1375 = vadd.f32 %v1336, %v1364
        %v1376 = vadd.f32 %v1337, %v1364
        %v1377 = vadd.f32 %v1338, %v1364
        %v1378 = vadd.f32 %v1339, %v1364
        %v1379 = vadd.f32 %v1340, %v1364
        %v1380 = vadd.f32 %v1341, %v1364
        %v1381 = vadd.f32 %v1342, %v1364
        %v1382 = vadd.f32 %v1343, %v1364
        %v1383 = vadd.f32 %v1344, %v1364
        %v1384 = vadd.f32 %v1345, %v1364
        %v1385 = vadd.f32 %v1346, %v1364
        %v1386 = vadd.f32 %v1347, %v1364
        %v1387 = vadd.f32 %v1348, %v1364
        %v1388 = vadd.f32 %v1349, %v1364
        %v1389 = vadd.f32 %v1350, %v1364
        %v1390 = vadd.f32 %v1351, %v1364
        %v1391 = vadd.f32 %v1352, %v1364
        %v1392 = vadd.f32 %v1353, %v1364
        %v1393 = vadd.f32 %v1354, %v1364
        %v1394 = vadd.f32 %v1355, %v1364
        %v1395 = vadd.f32 %v1356, %v1364
        %v1396 = vadd.f32 %v1357, %v1364
        %v1397 = vadd.f32 %v1358, %v1364
        %1398 = vst [vmem:[%s339] sm:$0xff] %v1366
        %1399 = vst [vmem:[%s339 + $0x8] sm:$0xff] %v1367
        %1400 = vst [vmem:[%s339 + $0x10] sm:$0xff] %v1368
        %1401 = vst [vmem:[%s339 + $0x18] sm:$0xff] %v1369
        %1402 = vst [vmem:[%s339 + $0x20] sm:$0xff] %v1370
        %1403 = vst [vmem:[%s339 + $0x28] sm:$0xff] %v1371
        %1404 = vst [vmem:[%s339 + $0x30] sm:$0xff] %v1372
        %1405 = vst [vmem:[%s339 + $0x38] sm:$0xff] %v1373
        %1406 = vst [vmem:[%s339 + $0x40] sm:$0xff] %v1374
        %1407 = vst [vmem:[%s339 + $0x48] sm:$0xff] %v1375
        %1408 = vst [vmem:[%s339 + $0x50] sm:$0xff] %v1376
        %1409 = vst [vmem:[%s339 + $0x58] sm:$0xff] %v1377
        %1410 = vst [vmem:[%s339 + $0x60] sm:$0xff] %v1378
        %1411 = vst [vmem:[%s339 + $0x68] sm:$0xff] %v1379
        %1412 = vst [vmem:[%s339 + $0x70] sm:$0xff] %v1380
        %1413 = vst [vmem:[%s339 + $0x78] sm:$0xff] %v1381
        %1414 = vst [vmem:[%s339 + $0x80] sm:$0xff] %v1382
        %1415 = vst [vmem:[%s339 + $0x88] sm:$0xff] %v1383
        %1416 = vst [vmem:[%s339 + $0x90] sm:$0xff] %v1384
        %1417 = vst [vmem:[%s339 + $0x98] sm:$0xff] %v1385
        %1418 = vst [vmem:[%s339 + $0xa0] sm:$0xff] %v1386
        %1419 = vst [vmem:[%s339 + $0xa8] sm:$0xff] %v1387
        %1420 = vst [vmem:[%s339 + $0xb0] sm:$0xff] %v1388
        %1421 = vst [vmem:[%s339 + $0xb8] sm:$0xff] %v1389
        %1422 = vst [vmem:[%s339 + $0xc0] sm:$0xff] %v1390
        %1423 = vst [vmem:[%s339 + $0xc8] sm:$0xff] %v1391
        %1424 = vst [vmem:[%s339 + $0xd0] sm:$0xff] %v1392
        %1425 = vst [vmem:[%s339 + $0xd8] sm:$0xff] %v1393
        %1426 = vst [vmem:[%s339 + $0xe0] sm:$0xff] %v1394
        %1427 = vst [vmem:[%s339 + $0xe8] sm:$0xff] %v1395
        %1428 = vst [vmem:[%s339 + $0xf0] sm:$0xff] %v1396
        %1429 = vst [vmem:[%s339 + $0xf8] sm:$0xff] %v1397
      $region48: #{run.1} parent=39 // pred_fallthru
        _
      %s1430 = smul.u32 32, %s21
      %p1431 = scmp.lt.s32.totalorder %s1430, 63
      %s1432 = scalar_select %p1431, %s1430, 63
      %p1433 = scmp.lt.s32.totalorder %s22, 0
      %s1434 = scalar_select %p1433, %s22, 0
      %s1435 = sadd.s32 %s1434, %s1432
      %s1436 = smul.addr %s1435, 8
      %s1437 = scalar_lea.vmem %s5, %s1436
      // Predicated region
      $region49: #{run.1} parent=39 // pred_check
        %p1438 = pneg %p189
      $region50: #{run.1} parent=39 // pred_check_branch
        %1440 = sbr.rel (%p1438) target = $region52
      $region51: #{run.1} parent=39 // pred_region
        %s1441 = smul.u32 32, %s21
      $region52: #{run.1} parent=39 // pred_fallthru
        _
    $region40: #{run.1} parent=5 // pred_fallthru
      _
    %p1442 = scmp.le.s32.totalorder 2, %s11
    // Predicated region
    $region53: #{run.1} parent=5 // pred_check
      %p1443 = pneg %p1442
    $region54: #{run.1} parent=5 // pred_check_branch
      %1445 = sbr.rel (%p1443) target = $region56
    $region55: #{run.1} parent=5 // pred_region
      %s1446 = ssub.s32 %s11, 2
      // Predicated region
      $region57: #{run.1} parent=55 // pred_check
        %p1447 = pneg %p195
      $region58: #{run.1} parent=55 // pred_check_branch
        %1449 = sbr.rel (%p1447) target = $region60
      $region59: #{run.1} parent=55 // pred_region
        %s1450 = smul.u32 32, %s24
        %p1451 = scmp.lt.s32.totalorder %s1450, 63
        %s1452 = scalar_select %p1451, %s1450, 63
        %p1453 = scmp.lt.s32.totalorder %s25, 0
        %s1454 = scalar_select %p1453, %s25, 0
        %s1455 = sadd.s32 %s1454, %s1452
        %s1456 = smul.addr %s1455, 8
        %s1457 = scalar_lea.vmem %s5, %s1456
      $region60: #{run.1} parent=55 // pred_fallthru
        _
    $region56: #{run.1} parent=5 // pred_fallthru
      _
  $region6: #{run.1} parent=0 // loop_footer
    %s15 = sadd.s32 1, %s11
  $region7: #{run.1} parent=0 // loop_footer_branch
    %10 = sbr.rel target = $region3
  $region8: #{run.1} parent=0 // loop_exit
    _

</llo_original>
